<compile_context>
chip_gen: v7x
topology: tpu7x:2x2x1
jax: 0.10.0
libtpu: 0.0.40
codegen_flags: <defaults>
</compile_context>

<pallas_src>
import math

import jax
import jax.numpy as jnp
from jax.experimental import pallas as pl
from jax.experimental.pallas import tpu as pltpu


# ----------------------------------------------------------------------------
# Guarded hardware queries (fall back to conservative defaults).
# ----------------------------------------------------------------------------
def _vmem_capacity_bytes():
    try:
        cap = int(getattr(pltpu.get_tpu_info(), "vmem_capacity_bytes", 0))
        if cap > 0:
            return cap
    except Exception:
        pass
    return 64 << 20  # conservative: v7x per-TensorCore VMEM


def _mxu_lane_target():
    """256 on v6e/v7x (2x256^2 MXU), 128 on v5e and earlier generations."""
    try:
        kind = jax.devices()[0].device_kind.lower()
    except Exception:
        return 256
    for old in ("v2", "v3", "v4", "v5"):
        if old in kind:
            return 128
    return 256


# ----------------------------------------------------------------------------
# Kernel
# ----------------------------------------------------------------------------
def _make_mlp_kernel(num_layers):
    """Apply `num_layers` Linear (+ReLU except last) layers entirely in VMEM."""

    def kernel(*refs):
        x_ref = refs[0]
        o_ref = refs[-1]
        wb_refs = refs[1:-1]  # interleaved (w0, b0, w1, b1, ...); biases are f32
        h = x_ref[...]        # compute dtype straight into the MXU
        for i in range(num_layers):
            w = wb_refs[2 * i][...]
            b = wb_refs[2 * i + 1][...]       # already f32
            acc = jnp.dot(h, w, preferred_element_type=jnp.float32)
            acc = acc + b
            if i < num_layers - 1:
                h = jnp.maximum(acc, 0.0).astype(w.dtype)   # ReLU in f32, back to MXU dtype
            else:
                o_ref[...] = acc.astype(o_ref.dtype)

    return kernel


# ----------------------------------------------------------------------------
# Lane packing: P consecutive rows per slab row, weights -> kron(I_P, W).
# ----------------------------------------------------------------------------
def _packing_factor(dims_in, dims_out, mxu_target, itemsize, weight_budget_bytes):
    g = mxu_target
    for d in list(dims_in) + list(dims_out):
        g = math.gcd(g, d)
    p = max(1, mxu_target // g)
    # Never fall straight back to 1: halve P until the (double-buffered)
    # block-diagonal weights fit the budget.
    while p > 1:
        packed = sum((p * i) * (p * o) * itemsize for i, o in zip(dims_in, dims_out))
        if 2 * packed <= weight_budget_bytes:
            break
        p //= 2
    return p


# ----------------------------------------------------------------------------
# Wrapper
# ----------------------------------------------------------------------------
def mlp_pallas(x2d, weights, biases, *, tm=8192, compute_dtype=jnp.bfloat16):
    """x2d: (N, input_dim); weights[i]: (in_i, out_i); biases[i]: (1, out_i)."""
    N, input_dim = x2d.shape
    out_dtype = x2d.dtype
    num_layers = len(weights)
    dims_in = [w.shape[0] for w in weights]
    dims_out = [w.shape[1] for w in weights]
    output_dim = dims_out[-1]

    cd_item = jnp.dtype(compute_dtype).itemsize
    out_item = jnp.dtype(out_dtype).itemsize

    vmem_cap = _vmem_capacity_bytes()
    vmem_budget = min(int(vmem_cap * 0.6), 96 << 20)
    mxu_target = _mxu_lane_target()

    # Rows-per-slab so every load/store is lane dense (multiples of 128 lanes)
    # and the MXU contraction dim is >= mxu_target instead of 16.
    p = _packing_factor(dims_in, dims_out, mxu_target, cd_item,
                        weight_budget_bytes=vmem_budget // 4)

    # Sublane alignment of a packed block: 16 rows for 16-bit dtypes, 8 for 32-bit.
    sub = 16 if cd_item == 2 else 8
    row_align = sub * p

    # --- Pack weights / biases once in the wrapper --------------------------
    wb_args = []
    wb_bytes = 0
    for w, b in zip(weights, biases):
        w_c = w.astype(compute_dtype)
        b_f = b.astype(jnp.float32)                      # pre-cast: no in-kernel cast
        if p > 1:
            w_c = jnp.kron(jnp.eye(p, dtype=compute_dtype), w_c)   # (P*in, P*out)
            b_f = jnp.tile(b_f, (1, p))                            # (1, P*out)
        wb_args.extend([w_c, b_f])
        wb_bytes += w_c.size * w_c.dtype.itemsize + b_f.size * 4

    # --- Row-tile sizing -----------------------------------------------------
    max_width = max(dims_out)
    per_slab_bytes = (2 * (p * input_dim) * cd_item          # x tile, double-buffered
                      + 2 * (p * output_dim) * out_item      # y tile, double-buffered
                      + 4 * (p * max_width) * 4)             # f32 inter-layer activations
    tile_budget = max(vmem_budget - 2 * wb_bytes, 4 << 20)
    tm_vmem_cap = max(row_align,
                      ((tile_budget // per_slab_bytes) * p // row_align) * row_align)

    n_min = pl.cdiv(N, row_align) * row_align                 # minimal padded row count
    # Keep >=2 grid steps when the problem allows it (dual-TC v7x sharding).
    if n_min >= 2 * row_align:
        tm_steps_cap = max(row_align, (n_min // 2 // row_align) * row_align)
    else:
        tm_steps_cap = row_align

    tm_eff = max(row_align, (tm // row_align) * row_align)
    tm_eff = min(tm_eff, tm_vmem_cap, tm_steps_cap, n_min)
    n_pad = pl.cdiv(N, tm_eff) * tm_eff

    # --- Pack x into lane-dense slabs (free row-major reshape) ---------------
    x_c = x2d.astype(compute_dtype)
    if n_pad != N:
        x_c = jnp.pad(x_c, ((0, n_pad - N), (0, 0)))
    x_packed = x_c.reshape(n_pad // p, p * input_dim)

    in_specs = [pl.BlockSpec((tm_eff // p, p * input_dim), lambda i: (i, 0))]
    for a in wb_args:
        in_specs.append(pl.BlockSpec(a.shape, lambda i: (0, 0)))
    out_spec = pl.BlockSpec((tm_eff // p, p * output_dim), lambda i: (i, 0))
    out_packed_shape = (n_pad // p, p * output_dim)

    # Advisory cost: MXU flops actually executed, honest HBM bytes.
    slabs = n_pad // p
    flops = sum(2 * slabs * w.shape[0] * w.shape[1] for w in wb_args[0::2])
    io_bytes = n_pad * input_dim * cd_item + n_pad * output_dim * out_item + wb_bytes
    cost = pl.CostEstimate(flops=flops, transcendentals=0, bytes_accessed=io_bytes)

    # VMEM limit from the chosen tile, capped by the generation-aware budget.
    x_tile = (tm_eff // p) * (p * input_dim) * cd_item
    y_tile = (tm_eff // p) * (p * output_dim) * out_item
    act = (tm_eff // p) * (p * max_width) * 4
    vmem_est = 2 * (x_tile + y_tile) + 2 * wb_bytes + 4 * act
    vmem_limit = int(min(vmem_budget, max(2 * vmem_est, 16 << 20)))

    y_packed = pl.pallas_call(
        _make_mlp_kernel(num_layers),
        out_shape=jax.ShapeDtypeStruct(out_packed_shape, out_dtype),
        grid_spec=pltpu.PrefetchScalarGridSpec(
            num_scalar_prefetch=0,
            grid=(n_pad // tm_eff,),
            in_specs=in_specs,
            out_specs=out_spec,
        ),
        compiler_params=pltpu.CompilerParams(
            dimension_semantics=("parallel",),
            vmem_limit_bytes=vmem_limit,
        ),
        cost_estimate=cost,
    )(x_packed, *wb_args)

    # Free reshape back to (n_pad, out) and drop the padded rows.
    return y_packed.reshape(n_pad, output_dim)[:N]


def mlp_forward(x, weights, biases, *, tm=8192, compute_dtype=jnp.bfloat16):
    """Handles arbitrary leading dims, like torch's nn.Linear on (..., input_dim)."""
    lead = x.shape[:-1]
    x2d = x.reshape(-1, x.shape[-1])
    y2d = mlp_pallas(x2d, weights, biases, tm=tm, compute_dtype=compute_dtype)
    return y2d.reshape(*lead, y2d.shape[-1])


# ----------------------------------------------------------------------------
# Params / reference
# ----------------------------------------------------------------------------
def init_mlp_params(key, input_dim, hidden_dim, output_dim, num_layers):
    """Deterministic synthetic init matching nn.Linear shapes (pre-transposed to (in, out))."""
    h = [hidden_dim] * (num_layers - 1)
    dims_in = [input_dim] + h
    dims_out = h + [output_dim]
    weights, biases = [], []
    for n_in, n_out in zip(dims_in, dims_out):
        key, kw, kb = jax.random.split(key, 3)
        bound = 1.0 / (n_in ** 0.5)
        w = jax.random.uniform(kw, (n_in, n_out), jnp.float32, -bound, bound)
        b = jax.random.uniform(kb, (1, n_out), jnp.float32, -bound, bound)
        weights.append(w)
        biases.append(b)
    return weights, biases


def mlp_reference(x, weights, biases):
    """Pure-JAX reference mirroring the PyTorch forward."""
    num_layers = len(weights)
    h = x
    for i, (w, b) in enumerate(zip(weights, biases)):
        h = jnp.dot(h, w) + b[0]
        if i < num_layers - 1:
            h = jnp.maximum(h, 0.0)
    return h


if __name__ == "__main__":
    # Shapes consistent with the module: MLP(input_dim=16, hidden_dim=32,
    # output_dim=16, num_layers=3) applied to a (batch=2, seq=8, 16) tensor.
    batch, seq = 2, 8
    input_dim, hidden_dim, output_dim, num_layers = 16, 32, 16, 3

    key = jax.random.PRNGKey(0)
    key, kx = jax.random.split(key)
    x = jax.random.normal(kx, (batch, seq, input_dim), jnp.float32)
    weights, biases = init_mlp_params(key, input_dim, hidden_dim, output_dim, num_layers)

    y_ref = mlp_reference(x, weights, biases)

    # f32 compute path: tight check against the reference.
    y_f32 = jax.block_until_ready(
        mlp_forward(x, weights, biases, compute_dtype=jnp.float32))
    assert y_f32.shape == (batch, seq, output_dim)
    assert jnp.allclose(y_f32, y_ref, atol=1e-4, rtol=1e-4), \
        float(jnp.max(jnp.abs(y_f32 - y_ref)))

    # Default bf16-fed-MXU path (f32 accumulation): tolerance widened for bf16.
    y_bf = jax.block_until_ready(mlp_forward(x, weights, biases))
    assert y_bf.shape == (batch, seq, output_dim)
    assert jnp.allclose(y_bf, y_ref, atol=5e-2, rtol=5e-2), \
        float(jnp.max(jnp.abs(y_bf - y_ref)))

    print("KERNEL_OK")
</pallas_src>

<mosaic_0001>
module attributes {stable_mosaic.version = 11 : i64} {
  func.func @kernel(%arg0: i32, %arg1: memref<8x256xf32, #tpu.memory_space<vmem>>, %arg2: memref<256x512xf32, #tpu.memory_space<vmem>>, %arg3: memref<1x512xf32, #tpu.memory_space<vmem>>, %arg4: memref<512x512xf32, #tpu.memory_space<vmem>>, %arg5: memref<1x512xf32, #tpu.memory_space<vmem>>, %arg6: memref<512x256xf32, #tpu.memory_space<vmem>>, %arg7: memref<1x256xf32, #tpu.memory_space<vmem>>, %arg8: memref<8x256xf32, #tpu.memory_space<vmem>>) attributes {dimension_semantics = [#tpu.dimension_semantics<parallel>], iteration_bounds = array<i64: 1>, scalar_prefetch = 0 : i64, scratch_operands = 0 : i64, tpu.core_type = #tpu.core_type<tc>, window_params = [{transform_indices = @transform_0, window_bounds = array<i64: 8, 256>}, {pipeline_mode = #tpu.pipeline_mode<synchronous>, transform_indices = @transform_1, window_bounds = array<i64: 256, 512>}, {pipeline_mode = #tpu.pipeline_mode<synchronous>, transform_indices = @transform_2, window_bounds = array<i64: 1, 512>}, {pipeline_mode = #tpu.pipeline_mode<synchronous>, transform_indices = @transform_3, window_bounds = array<i64: 512, 512>}, {pipeline_mode = #tpu.pipeline_mode<synchronous>, transform_indices = @transform_4, window_bounds = array<i64: 1, 512>}, {pipeline_mode = #tpu.pipeline_mode<synchronous>, transform_indices = @transform_5, window_bounds = array<i64: 512, 256>}, {pipeline_mode = #tpu.pipeline_mode<synchronous>, transform_indices = @transform_6, window_bounds = array<i64: 1, 256>}, {transform_indices = @transform_7, window_bounds = array<i64: 8, 256>}]} {
    %c0 = arith.constant 0 : index
    %c0_0 = arith.constant 0 : index
    %0 = vector.load %arg1[%c0, %c0_0] : memref<8x256xf32, #tpu.memory_space<vmem>>, vector<8x256xf32>
    %c0_1 = arith.constant 0 : index
    %c0_2 = arith.constant 0 : index
    %1 = vector.load %arg2[%c0_1, %c0_2] : memref<256x512xf32, #tpu.memory_space<vmem>>, vector<256x512xf32>
    %c0_3 = arith.constant 0 : index
    %c0_4 = arith.constant 0 : index
    %2 = vector.load %arg3[%c0_3, %c0_4] : memref<1x512xf32, #tpu.memory_space<vmem>>, vector<1x512xf32>
    %cst = arith.constant dense<0.000000e+00> : vector<8x512xf32>
    %3 = tpu.matmul %0, %1, %cst {dimension_numbers = #tpu.dot_dimension_numbers<[1], [0], [0], [1], [0, 0, 1, 1], [], []>} : vector<8x256xf32>, vector<256x512xf32>, vector<8x512xf32> -> vector<8x512xf32>
    %4 = vector.broadcast %2 : vector<1x512xf32> to vector<8x512xf32>
    %5 = arith.addf %3, %4 : vector<8x512xf32>
    %cst_5 = arith.constant 0.000000e+00 : f32
    %6 = vector.broadcast %cst_5 : f32 to vector<8x512xf32>
    %7 = arith.maximumf %5, %6 : vector<8x512xf32>
    %c0_6 = arith.constant 0 : index
    %c0_7 = arith.constant 0 : index
    %8 = vector.load %arg4[%c0_6, %c0_7] : memref<512x512xf32, #tpu.memory_space<vmem>>, vector<512x512xf32>
    %c0_8 = arith.constant 0 : index
    %c0_9 = arith.constant 0 : index
    %9 = vector.load %arg5[%c0_8, %c0_9] : memref<1x512xf32, #tpu.memory_space<vmem>>, vector<1x512xf32>
    %cst_10 = arith.constant dense<0.000000e+00> : vector<8x512xf32>
    %10 = tpu.matmul %7, %8, %cst_10 {dimension_numbers = #tpu.dot_dimension_numbers<[1], [0], [0], [1], [0, 0, 1, 1], [], []>} : vector<8x512xf32>, vector<512x512xf32>, vector<8x512xf32> -> vector<8x512xf32>
    %11 = vector.broadcast %9 : vector<1x512xf32> to vector<8x512xf32>
    %12 = arith.addf %10, %11 : vector<8x512xf32>
    %cst_11 = arith.constant 0.000000e+00 : f32
    %13 = vector.broadcast %cst_11 : f32 to vector<8x512xf32>
    %14 = arith.maximumf %12, %13 : vector<8x512xf32>
    %c0_12 = arith.constant 0 : index
    %c0_13 = arith.constant 0 : index
    %15 = vector.load %arg6[%c0_12, %c0_13] : memref<512x256xf32, #tpu.memory_space<vmem>>, vector<512x256xf32>
    %c0_14 = arith.constant 0 : index
    %c0_15 = arith.constant 0 : index
    %16 = vector.load %arg7[%c0_14, %c0_15] : memref<1x256xf32, #tpu.memory_space<vmem>>, vector<1x256xf32>
    %cst_16 = arith.constant dense<0.000000e+00> : vector<8x256xf32>
    %17 = tpu.matmul %14, %15, %cst_16 {dimension_numbers = #tpu.dot_dimension_numbers<[1], [0], [0], [1], [0, 0, 1, 1], [], []>} : vector<8x512xf32>, vector<512x256xf32>, vector<8x256xf32> -> vector<8x256xf32>
    %18 = vector.broadcast %16 : vector<1x256xf32> to vector<8x256xf32>
    %19 = arith.addf %17, %18 : vector<8x256xf32>
    %c0_17 = arith.constant 0 : index
    %c0_18 = arith.constant 0 : index
    %20 = vector.load %arg8[%c0_17, %c0_18] : memref<8x256xf32, #tpu.memory_space<vmem>>, vector<8x256xf32>
    tpu.vector_store %arg8[%c0_17, %c0_18], %19 {strides = array<i32>} : memref<8x256xf32, #tpu.memory_space<vmem>>, vector<8x256xf32>,
    return
  }
  func.func @transform_0(%arg0: i32) -> (i32, i32) {
    %c0_i32 = arith.constant 0 : i32
    %c0_i32_0 = arith.constant 0 : i32
    return %arg0, %c0_i32 : i32, i32
  }
  func.func @transform_1(%arg0: i32) -> (i32, i32) {
    %c0_i32 = arith.constant 0 : i32
    %c0_i32_0 = arith.constant 0 : i32
    %c0_i32_1 = arith.constant 0 : i32
    return %c0_i32, %c0_i32_0 : i32, i32
  }
  func.func @transform_2(%arg0: i32) -> (i32, i32) {
    %c0_i32 = arith.constant 0 : i32
    %c0_i32_0 = arith.constant 0 : i32
    %c0_i32_1 = arith.constant 0 : i32
    return %c0_i32, %c0_i32_0 : i32, i32
  }
  func.func @transform_3(%arg0: i32) -> (i32, i32) {
    %c0_i32 = arith.constant 0 : i32
    %c0_i32_0 = arith.constant 0 : i32
    %c0_i32_1 = arith.constant 0 : i32
    return %c0_i32, %c0_i32_0 : i32, i32
  }
  func.func @transform_4(%arg0: i32) -> (i32, i32) {
    %c0_i32 = arith.constant 0 : i32
    %c0_i32_0 = arith.constant 0 : i32
    %c0_i32_1 = arith.constant 0 : i32
    return %c0_i32, %c0_i32_0 : i32, i32
  }
  func.func @transform_5(%arg0: i32) -> (i32, i32) {
    %c0_i32 = arith.constant 0 : i32
    %c0_i32_0 = arith.constant 0 : i32
    %c0_i32_1 = arith.constant 0 : i32
    return %c0_i32, %c0_i32_0 : i32, i32
  }
  func.func @transform_6(%arg0: i32) -> (i32, i32) {
    %c0_i32 = arith.constant 0 : i32
    %c0_i32_0 = arith.constant 0 : i32
    %c0_i32_1 = arith.constant 0 : i32
    return %c0_i32, %c0_i32_0 : i32, i32
  }
  func.func @transform_7(%arg0: i32) -> (i32, i32) {
    %c0_i32 = arith.constant 0 : i32
    %c0_i32_0 = arith.constant 0 : i32
    return %arg0, %c0_i32 : i32, i32
  }
}

</mosaic_0001>

<llo_original>
// kernel: tpu_custom_call.1
$region0: #{tpu_custom_call.1}
  #allocation0 [shape = 'u32[]', space=smem, size = 0x4, offset = 0x4, fixed_abs, tag = 'smem constant byte address 0x4 - core index']
  #allocation1 [shape = 'u32[144,128]{1,0:T(1,128)}', space=vmem, size = 0x12000, scoped, tag = 'internal scratch']
  %s0 = inlined_call_operand.hbm [shape: f32[8,256], index: 0, kind: input, shape index: {}]
  %s1 = inlined_call_operand.hbm [shape: f32[256,512], index: 1, kind: input, shape index: {}]
  %s2 = inlined_call_operand.vmem [shape: f32[1,512], index: 2, kind: input, shape index: {}]
  %s3 = inlined_call_operand.hbm [shape: f32[512,512], index: 3, kind: input, shape index: {}]
  %s4 = inlined_call_operand.vmem [shape: f32[1,512], index: 4, kind: input, shape index: {}]
  %s5 = inlined_call_operand.hbm [shape: f32[512,256], index: 5, kind: input, shape index: {}]
  %s6 = inlined_call_operand.vmem [shape: f32[1,256], index: 6, kind: input, shape index: {}]
  %s7 = inlined_call_operand.hbm [shape: f32[8,256], index: 7, kind: output, shape index: {}]
  %s8 = sld [smem:[#allocation0]]
  $region54: #{tpu_custom_call.1} parent=0
    _
  %s10 = ssub.s32 1, %s8
  %s11 = scalar_select 0, %s10, %s8
  $region1: #{tpu_custom_call.1} parent=0
    #allocation2 [shape = 'u8[8192]{0}', space=vmem, size = 0x2000, scoped, tag = 'input window, operand 0, single buffered']
    #allocation3 [shape = 's32[1]{0}', space=sflag, size = 0x4, scoped, tag = 'scoped memory for tpu_custom_call.1']
    #allocation4 [shape = 's32[1]{0}', space=sflag, size = 0x4, scoped, tag = 'scoped memory for tpu_custom_call.1']
    #allocation5 [shape = 'u8[524288]{0}', space=vmem, size = 0x80000, scoped, tag = 'input window, operand 1, single buffered']
    #allocation6 [shape = 's32[1]{0}', space=sflag, size = 0x4, scoped, tag = 'scoped memory for tpu_custom_call.1']
    #allocation7 [shape = 'u8[1048576]{0}', space=vmem, size = 0x100000, scoped, tag = 'input window, operand 3, single buffered']
    #allocation8 [shape = 'u8[524288]{0}', space=vmem, size = 0x80000, scoped, tag = 'input window, operand 5, single buffered']
    #allocation9 [shape = 's32[1]{0}', space=sflag, size = 0x4, scoped, tag = 'scoped memory for tpu_custom_call.1']
    #allocation10 [shape = 'u8[8192]{0}', space=vmem, size = 0x2000, scoped, tag = 'output window, operand 0, single buffered']
    %12 = vsyncpa [#allocation3], 0
    %13 = vsyncpa [#allocation6], 0
    %14 = vsyncpa [#allocation9], 0
    %15 = vsyncpa [#allocation4], 0
    // Predicated region
    $region2: #{tpu_custom_call.1} parent=1 // pred_check
      _
    $region3: #{tpu_custom_call.1} parent=1 // pred_check_branch
      %17 = sbr.rel (0) target = $region5
    $region4: #{tpu_custom_call.1} parent=1 // pred_region
      %s19 = ssub.s32 256, 256
      %20 = vsyncadd [#allocation3], %s19
      %s22 = sshll.u32 [#allocation2], 4
      %s23 = int_to_ptr.vmem [resolvable:$true] %s22
      %25 = dma.hbm_to_vmem [thread:$0]  %s0, 256, %s23, [#allocation3]
    $region5: #{tpu_custom_call.1} parent=1 // pred_fallthru
      _
    // Predicated region
    $region6: #{tpu_custom_call.1} parent=1 // pred_check
      _
    $region7: #{tpu_custom_call.1} parent=1 // pred_check_branch
      %27 = sbr.rel (0) target = $region9
    $region8: #{tpu_custom_call.1} parent=1 // pred_region
      %s29 = ssub.s32 16384, 16384
      %30 = vsyncadd [#allocation6], %s29
      %s31 = sshll.u32 [#allocation5], 4
      %s32 = int_to_ptr.vmem [resolvable:$true] %s31
      %37 = dma.hbm_to_vmem [thread:$0]  %s1, 16384, %s32, [#allocation6], 512, 512, 32
    $region9: #{tpu_custom_call.1} parent=1 // pred_fallthru
      _
    // Predicated region
    $region10: #{tpu_custom_call.1} parent=1 // pred_check
      _
    $region11: #{tpu_custom_call.1} parent=1 // pred_check_branch
      %39 = sbr.rel (0) target = $region13
    $region12: #{tpu_custom_call.1} parent=1 // pred_region
      _
    $region13: #{tpu_custom_call.1} parent=1 // pred_fallthru
      _
    // Predicated region
    $region14: #{tpu_custom_call.1} parent=1 // pred_check
      _
    $region15: #{tpu_custom_call.1} parent=1 // pred_check_branch
      %41 = sbr.rel (0) target = $region17
    $region16: #{tpu_custom_call.1} parent=1 // pred_region
      %s43 = ssub.s32 32768, 32768
      %44 = vsyncadd [#allocation6], %s43
      %s45 = sshll.u32 [#allocation7], 4
      %s46 = int_to_ptr.vmem [resolvable:$true] %s45
      %51 = dma.hbm_to_vmem [thread:$0]  %s3, 32768, %s46, [#allocation6], 512, 512, 32
    $region17: #{tpu_custom_call.1} parent=1 // pred_fallthru
      _
    // Predicated region
    $region18: #{tpu_custom_call.1} parent=1 // pred_check
      _
    $region19: #{tpu_custom_call.1} parent=1 // pred_check_branch
      %53 = sbr.rel (0) target = $region21
    $region20: #{tpu_custom_call.1} parent=1 // pred_region
      _
    $region21: #{tpu_custom_call.1} parent=1 // pred_fallthru
      _
    // Predicated region
    $region22: #{tpu_custom_call.1} parent=1 // pred_check
      _
    $region23: #{tpu_custom_call.1} parent=1 // pred_check_branch
      %55 = sbr.rel (0) target = $region25
    $region24: #{tpu_custom_call.1} parent=1 // pred_region
      %s57 = ssub.s32 16384, 16384
      %58 = vsyncadd [#allocation9], %s57
      %s59 = sshll.u32 [#allocation8], 4
      %s60 = int_to_ptr.vmem [resolvable:$true] %s59
      %65 = dma.hbm_to_vmem [thread:$0]  %s5, 16384, %s60, [#allocation9], 256, 256, 16
    $region25: #{tpu_custom_call.1} parent=1 // pred_fallthru
      _
    // Predicated region
    $region26: #{tpu_custom_call.1} parent=1 // pred_check
      _
    $region27: #{tpu_custom_call.1} parent=1 // pred_check_branch
      %67 = sbr.rel (0) target = $region29
    $region28: #{tpu_custom_call.1} parent=1 // pred_region
      _
    $region29: #{tpu_custom_call.1} parent=1 // pred_fallthru
      _
    // Predicated region
    $region30: #{tpu_custom_call.1} parent=1 // pred_check
      _
    $region31: #{tpu_custom_call.1} parent=1 // pred_check_branch
      %69 = sbr.rel (0) target = $region33
    $region32: #{tpu_custom_call.1} parent=1 // pred_region
      %70 = dma.done [#allocation3], 256
    $region33: #{tpu_custom_call.1} parent=1 // pred_fallthru
      _
    // Predicated region
    $region34: #{tpu_custom_call.1} parent=1 // pred_check
      _
    $region35: #{tpu_custom_call.1} parent=1 // pred_check_branch
      %72 = sbr.rel (0) target = $region37
    $region36: #{tpu_custom_call.1} parent=1 // pred_region
      %73 = dma.done [#allocation6], 16384
    $region37: #{tpu_custom_call.1} parent=1 // pred_fallthru
      _
    // Predicated region
    $region38: #{tpu_custom_call.1} parent=1 // pred_check
      _
    $region39: #{tpu_custom_call.1} parent=1 // pred_check_branch
      %75 = sbr.rel (0) target = $region41
    $region40: #{tpu_custom_call.1} parent=1 // pred_region
      %76 = dma.done [#allocation6], 32768
    $region41: #{tpu_custom_call.1} parent=1 // pred_fallthru
      _
    // Predicated region
    $region42: #{tpu_custom_call.1} parent=1 // pred_check
      _
    $region43: #{tpu_custom_call.1} parent=1 // pred_check_branch
      %78 = sbr.rel (0) target = $region45
    $region44: #{tpu_custom_call.1} parent=1 // pred_region
      %79 = dma.done [#allocation9], 16384
    $region45: #{tpu_custom_call.1} parent=1 // pred_fallthru
      _
    %v80 = vld [vmem:[#allocation2] sm:$0xff]
    %v81 = vld [vmem:[#allocation2 + $0x8] sm:$0xff]
    %v82 = vld [vmem:[#allocation5] sm:$0xff]
    %v83 = vld [vmem:[#allocation5 + $0x8] sm:$0xff]
    %v84 = vld [vmem:[#allocation5 + $0x10] sm:$0xff]
    %v85 = vld [vmem:[#allocation5 + $0x18] sm:$0xff]
    %v86 = vld [vmem:[#allocation5 + $0x20] sm:$0xff]
    %v87 = vld [vmem:[#allocation5 + $0x28] sm:$0xff]
    %v88 = vld [vmem:[#allocation5 + $0x30] sm:$0xff]
    %v89 = vld [vmem:[#allocation5 + $0x38] sm:$0xff]
    %v90 = vld [vmem:[#allocation5 + $0x40] sm:$0xff]
    %v91 = vld [vmem:[#allocation5 + $0x48] sm:$0xff]
    %v92 = vld [vmem:[#allocation5 + $0x50] sm:$0xff]
    %v93 = vld [vmem:[#allocation5 + $0x58] sm:$0xff]
    %v94 = vld [vmem:[#allocation5 + $0x60] sm:$0xff]
    %v95 = vld [vmem:[#allocation5 + $0x68] sm:$0xff]
    %v96 = vld [vmem:[#allocation5 + $0x70] sm:$0xff]
    %v97 = vld [vmem:[#allocation5 + $0x78] sm:$0xff]
    %v98 = vld [vmem:[#allocation5 + $0x80] sm:$0xff]
    %v99 = vld [vmem:[#allocation5 + $0x88] sm:$0xff]
    %v100 = vld [vmem:[#allocation5 + $0x90] sm:$0xff]
    %v101 = vld [vmem:[#allocation5 + $0x98] sm:$0xff]
    %v102 = vld [vmem:[#allocation5 + $0xa0] sm:$0xff]
    %v103 = vld [vmem:[#allocation5 + $0xa8] sm:$0xff]
    %v104 = vld [vmem:[#allocation5 + $0xb0] sm:$0xff]
    %v105 = vld [vmem:[#allocation5 + $0xb8] sm:$0xff]
    %v106 = vld [vmem:[#allocation5 + $0xc0] sm:$0xff]
    %v107 = vld [vmem:[#allocation5 + $0xc8] sm:$0xff]
    %v108 = vld [vmem:[#allocation5 + $0xd0] sm:$0xff]
    %v109 = vld [vmem:[#allocation5 + $0xd8] sm:$0xff]
    %v110 = vld [vmem:[#allocation5 + $0xe0] sm:$0xff]
    %v111 = vld [vmem:[#allocation5 + $0xe8] sm:$0xff]
    %v112 = vld [vmem:[#allocation5 + $0xf0] sm:$0xff]
    %v113 = vld [vmem:[#allocation5 + $0xf8] sm:$0xff]
    %v114 = vld [vmem:[#allocation5 + $0x100] sm:$0xff]
    %v115 = vld [vmem:[#allocation5 + $0x108] sm:$0xff]
    %v116 = vld [vmem:[#allocation5 + $0x110] sm:$0xff]
    %v117 = vld [vmem:[#allocation5 + $0x118] sm:$0xff]
    %v118 = vld [vmem:[#allocation5 + $0x120] sm:$0xff]
    %v119 = vld [vmem:[#allocation5 + $0x128] sm:$0xff]
    %v120 = vld [vmem:[#allocation5 + $0x130] sm:$0xff]
    %v121 = vld [vmem:[#allocation5 + $0x138] sm:$0xff]
    %v122 = vld [vmem:[#allocation5 + $0x140] sm:$0xff]
    %v123 = vld [vmem:[#allocation5 + $0x148] sm:$0xff]
    %v124 = vld [vmem:[#allocation5 + $0x150] sm:$0xff]
    %v125 = vld [vmem:[#allocation5 + $0x158] sm:$0xff]
    %v126 = vld [vmem:[#allocation5 + $0x160] sm:$0xff]
    %v127 = vld [vmem:[#allocation5 + $0x168] sm:$0xff]
    %v128 = vld [vmem:[#allocation5 + $0x170] sm:$0xff]
    %v129 = vld [vmem:[#allocation5 + $0x178] sm:$0xff]
    %v130 = vld [vmem:[#allocation5 + $0x180] sm:$0xff]
    %v131 = vld [vmem:[#allocation5 + $0x188] sm:$0xff]
    %v132 = vld [vmem:[#allocation5 + $0x190] sm:$0xff]
    %v133 = vld [vmem:[#allocation5 + $0x198] sm:$0xff]
    %v134 = vld [vmem:[#allocation5 + $0x1a0] sm:$0xff]
    %v135 = vld [vmem:[#allocation5 + $0x1a8] sm:$0xff]
    %v136 = vld [vmem:[#allocation5 + $0x1b0] sm:$0xff]
    %v137 = vld [vmem:[#allocation5 + $0x1b8] sm:$0xff]
    %v138 = vld [vmem:[#allocation5 + $0x1c0] sm:$0xff]
    %v139 = vld [vmem:[#allocation5 + $0x1c8] sm:$0xff]
    %v140 = vld [vmem:[#allocation5 + $0x1d0] sm:$0xff]
    %v141 = vld [vmem:[#allocation5 + $0x1d8] sm:$0xff]
    %v142 = vld [vmem:[#allocation5 + $0x1e0] sm:$0xff]
    %v143 = vld [vmem:[#allocation5 + $0x1e8] sm:$0xff]
    %v144 = vld [vmem:[#allocation5 + $0x1f0] sm:$0xff]
    %v145 = vld [vmem:[#allocation5 + $0x1f8] sm:$0xff]
    %v146 = vld [vmem:[#allocation5 + $0x200] sm:$0xff]
    %v147 = vld [vmem:[#allocation5 + $0x208] sm:$0xff]
    %v148 = vld [vmem:[#allocation5 + $0x210] sm:$0xff]
    %v149 = vld [vmem:[#allocation5 + $0x218] sm:$0xff]
    %v150 = vld [vmem:[#allocation5 + $0x220] sm:$0xff]
    %v151 = vld [vmem:[#allocation5 + $0x228] sm:$0xff]
    %v152 = vld [vmem:[#allocation5 + $0x230] sm:$0xff]
    %v153 = vld [vmem:[#allocation5 + $0x238] sm:$0xff]
    %v154 = vld [vmem:[#allocation5 + $0x240] sm:$0xff]
    %v155 = vld [vmem:[#allocation5 + $0x248] sm:$0xff]
    %v156 = vld [vmem:[#allocation5 + $0x250] sm:$0xff]
    %v157 = vld [vmem:[#allocation5 + $0x258] sm:$0xff]
    %v158 = vld [vmem:[#allocation5 + $0x260] sm:$0xff]
    %v159 = vld [vmem:[#allocation5 + $0x268] sm:$0xff]
    %v160 = vld [vmem:[#allocation5 + $0x270] sm:$0xff]
    %v161 = vld [vmem:[#allocation5 + $0x278] sm:$0xff]
    %v162 = vld [vmem:[#allocation5 + $0x280] sm:$0xff]
    %v163 = vld [vmem:[#allocation5 + $0x288] sm:$0xff]
    %v164 = vld [vmem:[#allocation5 + $0x290] sm:$0xff]
    %v165 = vld [vmem:[#allocation5 + $0x298] sm:$0xff]
    %v166 = vld [vmem:[#allocation5 + $0x2a0] sm:$0xff]
    %v167 = vld [vmem:[#allocation5 + $0x2a8] sm:$0xff]
    %v168 = vld [vmem:[#allocation5 + $0x2b0] sm:$0xff]
    %v169 = vld [vmem:[#allocation5 + $0x2b8] sm:$0xff]
    %v170 = vld [vmem:[#allocation5 + $0x2c0] sm:$0xff]
    %v171 = vld [vmem:[#allocation5 + $0x2c8] sm:$0xff]
    %v172 = vld [vmem:[#allocation5 + $0x2d0] sm:$0xff]
    %v173 = vld [vmem:[#allocation5 + $0x2d8] sm:$0xff]
    %v174 = vld [vmem:[#allocation5 + $0x2e0] sm:$0xff]
    %v175 = vld [vmem:[#allocation5 + $0x2e8] sm:$0xff]
    %v176 = vld [vmem:[#allocation5 + $0x2f0] sm:$0xff]
    %v177 = vld [vmem:[#allocation5 + $0x2f8] sm:$0xff]
    %v178 = vld [vmem:[#allocation5 + $0x300] sm:$0xff]
    %v179 = vld [vmem:[#allocation5 + $0x308] sm:$0xff]
    %v180 = vld [vmem:[#allocation5 + $0x310] sm:$0xff]
    %v181 = vld [vmem:[#allocation5 + $0x318] sm:$0xff]
    %v182 = vld [vmem:[#allocation5 + $0x320] sm:$0xff]
    %v183 = vld [vmem:[#allocation5 + $0x328] sm:$0xff]
    %v184 = vld [vmem:[#allocation5 + $0x330] sm:$0xff]
    %v185 = vld [vmem:[#allocation5 + $0x338] sm:$0xff]
    %v186 = vld [vmem:[#allocation5 + $0x340] sm:$0xff]
    %v187 = vld [vmem:[#allocation5 + $0x348] sm:$0xff]
    %v188 = vld [vmem:[#allocation5 + $0x350] sm:$0xff]
    %v189 = vld [vmem:[#allocation5 + $0x358] sm:$0xff]
    %v190 = vld [vmem:[#allocation5 + $0x360] sm:$0xff]
    %v191 = vld [vmem:[#allocation5 + $0x368] sm:$0xff]
    %v192 = vld [vmem:[#allocation5 + $0x370] sm:$0xff]
    %v193 = vld [vmem:[#allocation5 + $0x378] sm:$0xff]
    %v194 = vld [vmem:[#allocation5 + $0x380] sm:$0xff]
    %v195 = vld [vmem:[#allocation5 + $0x388] sm:$0xff]
    %v196 = vld [vmem:[#allocation5 + $0x390] sm:$0xff]
    %v197 = vld [vmem:[#allocation5 + $0x398] sm:$0xff]
    %v198 = vld [vmem:[#allocation5 + $0x3a0] sm:$0xff]
    %v199 = vld [vmem:[#allocation5 + $0x3a8] sm:$0xff]
    %v200 = vld [vmem:[#allocation5 + $0x3b0] sm:$0xff]
    %v201 = vld [vmem:[#allocation5 + $0x3b8] sm:$0xff]
    %v202 = vld [vmem:[#allocation5 + $0x3c0] sm:$0xff]
    %v203 = vld [vmem:[#allocation5 + $0x3c8] sm:$0xff]
    %v204 = vld [vmem:[#allocation5 + $0x3d0] sm:$0xff]
    %v205 = vld [vmem:[#allocation5 + $0x3d8] sm:$0xff]
    %v206 = vld [vmem:[#allocation5 + $0x3e0] sm:$0xff]
    %v207 = vld [vmem:[#allocation5 + $0x3e8] sm:$0xff]
    %v208 = vld [vmem:[#allocation5 + $0x3f0] sm:$0xff]
    %v209 = vld [vmem:[#allocation5 + $0x3f8] sm:$0xff]
    %v210 = vld [vmem:[%s2] sm:$0xf]
    %v212 = vlaneseq
    %v213 = vshrl.u32 %v212, 7
    %v214 = vsub.s32 0, %v213
    %v215 = vrot.slane %v210, %v214
    %v216 = vlaneseq
    %v217 = vshrl.u32 %v216, 7
    %v218 = vsub.s32 1, %v217
    %v219 = vrot.slane %v210, %v218
    %v220 = vlaneseq
    %v221 = vshrl.u32 %v220, 7
    %v222 = vsub.s32 2, %v221
    %v223 = vrot.slane %v210, %v222
    %v224 = vlaneseq
    %v225 = vshrl.u32 %v224, 7
    %v226 = vsub.s32 3, %v225
    %v227 = vrot.slane %v210, %v226
    %232 = vmatprep.subr.mxu0 %v83
    %233 = vmatpush1.msra.mxu0 %v82
    %234 = vmatprep.subr.mxu0 %v87
    %235 = vmatpush1.msra.mxu0 %v86
    %236 = vmatprep.subr.mxu0 %v91
    %237 = vmatpush1.msra.mxu0 %v90
    %238 = vmatprep.subr.mxu0 %v95
    %239 = vmatpush1.msra.mxu0 %v94
    %240 = vmatprep.subr.mxu0 %v99
    %241 = vmatpush1.msra.mxu0 %v98
    %242 = vmatprep.subr.mxu0 %v103
    %243 = vmatpush1.msra.mxu0 %v102
    %244 = vmatprep.subr.mxu0 %v107
    %245 = vmatpush1.msra.mxu0 %v106
    %246 = vmatprep.subr.mxu0 %v111
    %247 = vmatpush1.msra.mxu0 %v110
    %248 = vmatprep.subr.mxu0 %v115
    %249 = vmatpush1.msra.mxu0 %v114
    %250 = vmatprep.subr.mxu0 %v119
    %251 = vmatpush1.msra.mxu0 %v118
    %252 = vmatprep.subr.mxu0 %v123
    %253 = vmatpush1.msra.mxu0 %v122
    %254 = vmatprep.subr.mxu0 %v127
    %255 = vmatpush1.msra.mxu0 %v126
    %256 = vmatprep.subr.mxu0 %v131
    %257 = vmatpush1.msra.mxu0 %v130
    %258 = vmatprep.subr.mxu0 %v135
    %259 = vmatpush1.msra.mxu0 %v134
    %260 = vmatprep.subr.mxu0 %v139
    %261 = vmatpush1.msra.mxu0 %v138
    %262 = vmatprep.subr.mxu0 %v143
    %263 = vmatpush1.msra.mxu0 %v142
    %264 = vmatprep.subr.mxu0 %v147
    %265 = vmatpush1.msra.mxu0 %v146
    %266 = vmatprep.subr.mxu0 %v151
    %267 = vmatpush1.msra.mxu0 %v150
    %268 = vmatprep.subr.mxu0 %v155
    %269 = vmatpush1.msra.mxu0 %v154
    %270 = vmatprep.subr.mxu0 %v159
    %271 = vmatpush1.msra.mxu0 %v158
    %272 = vmatprep.subr.mxu0 %v163
    %273 = vmatpush1.msra.mxu0 %v162
    %274 = vmatprep.subr.mxu0 %v167
    %275 = vmatpush1.msra.mxu0 %v166
    %276 = vmatprep.subr.mxu0 %v171
    %277 = vmatpush1.msra.mxu0 %v170
    %278 = vmatprep.subr.mxu0 %v175
    %279 = vmatpush1.msra.mxu0 %v174
    %280 = vmatprep.subr.mxu0 %v179
    %281 = vmatpush1.msra.mxu0 %v178
    %282 = vmatprep.subr.mxu0 %v183
    %283 = vmatpush1.msra.mxu0 %v182
    %284 = vmatprep.subr.mxu0 %v187
    %285 = vmatpush1.msra.mxu0 %v186
    %286 = vmatprep.subr.mxu0 %v191
    %287 = vmatpush1.msra.mxu0 %v190
    %288 = vmatprep.subr.mxu0 %v195
    %289 = vmatpush1.msra.mxu0 %v194
    %290 = vmatprep.subr.mxu0 %v199
    %291 = vmatpush1.msra.mxu0 %v198
    %292 = vmatprep.subr.mxu0 %v203
    %293 = vmatpush1.msra.mxu0 %v202
    %294 = vmatprep.subr.mxu0 %v207
    %295 = vmatpush1.msra.mxu0 %v206
    %296 = vmatprep.mubr.f32.mxu0 %v81
    %297 = vmatmul.mubr.f32.gmra.mrb[0].mxu0 %v80
    %v298 = vpop.f32.mrb[0].mxu0
    %v299 = vadd.f32 %v215, %v298
    %v300 = vpop.f32.mrb[0].mxu0
    %v301 = vadd.f32 %v219, %v300
    %302 = vdwg.mxu0
    %303 = vmatprep.subr.mxu0 %v85
    %304 = vmatpush1.msra.mxu0 %v84
    %305 = vmatprep.subr.mxu0 %v89
    %306 = vmatpush1.msra.mxu0 %v88
    %307 = vmatprep.subr.mxu0 %v93
    %308 = vmatpush1.msra.mxu0 %v92
    %309 = vmatprep.subr.mxu0 %v97
    %310 = vmatpush1.msra.mxu0 %v96
    %311 = vmatprep.subr.mxu0 %v101
    %312 = vmatpush1.msra.mxu0 %v100
    %313 = vmatprep.subr.mxu0 %v105
    %314 = vmatpush1.msra.mxu0 %v104
    %315 = vmatprep.subr.mxu0 %v109
    %316 = vmatpush1.msra.mxu0 %v108
    %317 = vmatprep.subr.mxu0 %v113
    %318 = vmatpush1.msra.mxu0 %v112
    %319 = vmatprep.subr.mxu0 %v117
    %320 = vmatpush1.msra.mxu0 %v116
    %321 = vmatprep.subr.mxu0 %v121
    %322 = vmatpush1.msra.mxu0 %v120
    %323 = vmatprep.subr.mxu0 %v125
    %324 = vmatpush1.msra.mxu0 %v124
    %325 = vmatprep.subr.mxu0 %v129
    %326 = vmatpush1.msra.mxu0 %v128
    %327 = vmatprep.subr.mxu0 %v133
    %328 = vmatpush1.msra.mxu0 %v132
    %329 = vmatprep.subr.mxu0 %v137
    %330 = vmatpush1.msra.mxu0 %v136
    %331 = vmatprep.subr.mxu0 %v141
    %332 = vmatpush1.msra.mxu0 %v140
    %333 = vmatprep.subr.mxu0 %v145
    %334 = vmatpush1.msra.mxu0 %v144
    %335 = vmatprep.subr.mxu0 %v149
    %336 = vmatpush1.msra.mxu0 %v148
    %337 = vmatprep.subr.mxu0 %v153
    %338 = vmatpush1.msra.mxu0 %v152
    %339 = vmatprep.subr.mxu0 %v157
    %340 = vmatpush1.msra.mxu0 %v156
    %341 = vmatprep.subr.mxu0 %v161
    %342 = vmatpush1.msra.mxu0 %v160
    %343 = vmatprep.subr.mxu0 %v165
    %344 = vmatpush1.msra.mxu0 %v164
    %345 = vmatprep.subr.mxu0 %v169
    %346 = vmatpush1.msra.mxu0 %v168
    %347 = vmatprep.subr.mxu0 %v173
    %348 = vmatpush1.msra.mxu0 %v172
    %349 = vmatprep.subr.mxu0 %v177
    %350 = vmatpush1.msra.mxu0 %v176
    %351 = vmatprep.subr.mxu0 %v181
    %352 = vmatpush1.msra.mxu0 %v180
    %353 = vmatprep.subr.mxu0 %v185
    %354 = vmatpush1.msra.mxu0 %v184
    %355 = vmatprep.subr.mxu0 %v189
    %356 = vmatpush1.msra.mxu0 %v188
    %357 = vmatprep.subr.mxu0 %v193
    %358 = vmatpush1.msra.mxu0 %v192
    %359 = vmatprep.subr.mxu0 %v197
    %360 = vmatpush1.msra.mxu0 %v196
    %361 = vmatprep.subr.mxu0 %v201
    %362 = vmatpush1.msra.mxu0 %v200
    %363 = vmatprep.subr.mxu0 %v205
    %364 = vmatpush1.msra.mxu0 %v204
    %365 = vmatprep.subr.mxu0 %v209
    %366 = vmatpush1.msra.mxu0 %v208
    %367 = vmatprep.mubr.f32.mxu0 %v81
    %368 = vmatmul.mubr.f32.gmra.mrb[0].mxu0 %v80
    %v369 = vpop.f32.mrb[0].mxu0
    %v370 = vadd.f32 %v223, %v369
    %v371 = vpop.f32.mrb[0].mxu0
    %v372 = vadd.f32 %v227, %v371
    %373 = vdwg.mxu0
    %v374 = vmax.f32 %v299, 0.0
    %v375 = vmax.f32 %v301, 0.0
    %v376 = vmax.f32 %v370, 0.0
    %v377 = vmax.f32 %v372, 0.0
    %v378 = vld [vmem:[#allocation7] sm:$0xff]
    %v379 = vld [vmem:[#allocation7 + $0x8] sm:$0xff]
    %v380 = vld [vmem:[#allocation7 + $0x10] sm:$0xff]
    %v381 = vld [vmem:[#allocation7 + $0x18] sm:$0xff]
    %v382 = vld [vmem:[#allocation7 + $0x20] sm:$0xff]
    %v383 = vld [vmem:[#allocation7 + $0x28] sm:$0xff]
    %v384 = vld [vmem:[#allocation7 + $0x30] sm:$0xff]
    %v385 = vld [vmem:[#allocation7 + $0x38] sm:$0xff]
    %v386 = vld [vmem:[#allocation7 + $0x40] sm:$0xff]
    %v387 = vld [vmem:[#allocation7 + $0x48] sm:$0xff]
    %v388 = vld [vmem:[#allocation7 + $0x50] sm:$0xff]
    %v389 = vld [vmem:[#allocation7 + $0x58] sm:$0xff]
    %v390 = vld [vmem:[#allocation7 + $0x60] sm:$0xff]
    %v391 = vld [vmem:[#allocation7 + $0x68] sm:$0xff]
    %v392 = vld [vmem:[#allocation7 + $0x70] sm:$0xff]
    %v393 = vld [vmem:[#allocation7 + $0x78] sm:$0xff]
    %v394 = vld [vmem:[#allocation7 + $0x80] sm:$0xff]
    %v395 = vld [vmem:[#allocation7 + $0x88] sm:$0xff]
    %v396 = vld [vmem:[#allocation7 + $0x90] sm:$0xff]
    %v397 = vld [vmem:[#allocation7 + $0x98] sm:$0xff]
    %v398 = vld [vmem:[#allocation7 + $0xa0] sm:$0xff]
    %v399 = vld [vmem:[#allocation7 + $0xa8] sm:$0xff]
    %v400 = vld [vmem:[#allocation7 + $0xb0] sm:$0xff]
    %v401 = vld [vmem:[#allocation7 + $0xb8] sm:$0xff]
    %v402 = vld [vmem:[#allocation7 + $0xc0] sm:$0xff]
    %v403 = vld [vmem:[#allocation7 + $0xc8] sm:$0xff]
    %v404 = vld [vmem:[#allocation7 + $0xd0] sm:$0xff]
    %v405 = vld [vmem:[#allocation7 + $0xd8] sm:$0xff]
    %v406 = vld [vmem:[#allocation7 + $0xe0] sm:$0xff]
    %v407 = vld [vmem:[#allocation7 + $0xe8] sm:$0xff]
    %v408 = vld [vmem:[#allocation7 + $0xf0] sm:$0xff]
    %v409 = vld [vmem:[#allocation7 + $0xf8] sm:$0xff]
    %v410 = vld [vmem:[#allocation7 + $0x100] sm:$0xff]
    %v411 = vld [vmem:[#allocation7 + $0x108] sm:$0xff]
    %v412 = vld [vmem:[#allocation7 + $0x110] sm:$0xff]
    %v413 = vld [vmem:[#allocation7 + $0x118] sm:$0xff]
    %v414 = vld [vmem:[#allocation7 + $0x120] sm:$0xff]
    %v415 = vld [vmem:[#allocation7 + $0x128] sm:$0xff]
    %v416 = vld [vmem:[#allocation7 + $0x130] sm:$0xff]
    %v417 = vld [vmem:[#allocation7 + $0x138] sm:$0xff]
    %v418 = vld [vmem:[#allocation7 + $0x140] sm:$0xff]
    %v419 = vld [vmem:[#allocation7 + $0x148] sm:$0xff]
    %v420 = vld [vmem:[#allocation7 + $0x150] sm:$0xff]
    %v421 = vld [vmem:[#allocation7 + $0x158] sm:$0xff]
    %v422 = vld [vmem:[#allocation7 + $0x160] sm:$0xff]
    %v423 = vld [vmem:[#allocation7 + $0x168] sm:$0xff]
    %v424 = vld [vmem:[#allocation7 + $0x170] sm:$0xff]
    %v425 = vld [vmem:[#allocation7 + $0x178] sm:$0xff]
    %v426 = vld [vmem:[#allocation7 + $0x180] sm:$0xff]
    %v427 = vld [vmem:[#allocation7 + $0x188] sm:$0xff]
    %v428 = vld [vmem:[#allocation7 + $0x190] sm:$0xff]
    %v429 = vld [vmem:[#allocation7 + $0x198] sm:$0xff]
    %v430 = vld [vmem:[#allocation7 + $0x1a0] sm:$0xff]
    %v431 = vld [vmem:[#allocation7 + $0x1a8] sm:$0xff]
    %v432 = vld [vmem:[#allocation7 + $0x1b0] sm:$0xff]
    %v433 = vld [vmem:[#allocation7 + $0x1b8] sm:$0xff]
    %v434 = vld [vmem:[#allocation7 + $0x1c0] sm:$0xff]
    %v435 = vld [vmem:[#allocation7 + $0x1c8] sm:$0xff]
    %v436 = vld [vmem:[#allocation7 + $0x1d0] sm:$0xff]
    %v437 = vld [vmem:[#allocation7 + $0x1d8] sm:$0xff]
    %v438 = vld [vmem:[#allocation7 + $0x1e0] sm:$0xff]
    %v439 = vld [vmem:[#allocation7 + $0x1e8] sm:$0xff]
    %v440 = vld [vmem:[#allocation7 + $0x1f0] sm:$0xff]
    %v441 = vld [vmem:[#allocation7 + $0x1f8] sm:$0xff]
    %v442 = vld [vmem:[#allocation7 + $0x200] sm:$0xff]
    %v443 = vld [vmem:[#allocation7 + $0x208] sm:$0xff]
    %v444 = vld [vmem:[#allocation7 + $0x210] sm:$0xff]
    %v445 = vld [vmem:[#allocation7 + $0x218] sm:$0xff]
    %v446 = vld [vmem:[#allocation7 + $0x220] sm:$0xff]
    %v447 = vld [vmem:[#allocation7 + $0x228] sm:$0xff]
    %v448 = vld [vmem:[#allocation7 + $0x230] sm:$0xff]
    %v449 = vld [vmem:[#allocation7 + $0x238] sm:$0xff]
    %v450 = vld [vmem:[#allocation7 + $0x240] sm:$0xff]
    %v451 = vld [vmem:[#allocation7 + $0x248] sm:$0xff]
    %v452 = vld [vmem:[#allocation7 + $0x250] sm:$0xff]
    %v453 = vld [vmem:[#allocation7 + $0x258] sm:$0xff]
    %v454 = vld [vmem:[#allocation7 + $0x260] sm:$0xff]
    %v455 = vld [vmem:[#allocation7 + $0x268] sm:$0xff]
    %v456 = vld [vmem:[#allocation7 + $0x270] sm:$0xff]
    %v457 = vld [vmem:[#allocation7 + $0x278] sm:$0xff]
    %v458 = vld [vmem:[#allocation7 + $0x280] sm:$0xff]
    %v459 = vld [vmem:[#allocation7 + $0x288] sm:$0xff]
    %v460 = vld [vmem:[#allocation7 + $0x290] sm:$0xff]
    %v461 = vld [vmem:[#allocation7 + $0x298] sm:$0xff]
    %v462 = vld [vmem:[#allocation7 + $0x2a0] sm:$0xff]
    %v463 = vld [vmem:[#allocation7 + $0x2a8] sm:$0xff]
    %v464 = vld [vmem:[#allocation7 + $0x2b0] sm:$0xff]
    %v465 = vld [vmem:[#allocation7 + $0x2b8] sm:$0xff]
    %v466 = vld [vmem:[#allocation7 + $0x2c0] sm:$0xff]
    %v467 = vld [vmem:[#allocation7 + $0x2c8] sm:$0xff]
    %v468 = vld [vmem:[#allocation7 + $0x2d0] sm:$0xff]
    %v469 = vld [vmem:[#allocation7 + $0x2d8] sm:$0xff]
    %v470 = vld [vmem:[#allocation7 + $0x2e0] sm:$0xff]
    %v471 = vld [vmem:[#allocation7 + $0x2e8] sm:$0xff]
    %v472 = vld [vmem:[#allocation7 + $0x2f0] sm:$0xff]
    %v473 = vld [vmem:[#allocation7 + $0x2f8] sm:$0xff]
    %v474 = vld [vmem:[#allocation7 + $0x300] sm:$0xff]
    %v475 = vld [vmem:[#allocation7 + $0x308] sm:$0xff]
    %v476 = vld [vmem:[#allocation7 + $0x310] sm:$0xff]
    %v477 = vld [vmem:[#allocation7 + $0x318] sm:$0xff]
    %v478 = vld [vmem:[#allocation7 + $0x320] sm:$0xff]
    %v479 = vld [vmem:[#allocation7 + $0x328] sm:$0xff]
    %v480 = vld [vmem:[#allocation7 + $0x330] sm:$0xff]
    %v481 = vld [vmem:[#allocation7 + $0x338] sm:$0xff]
    %v482 = vld [vmem:[#allocation7 + $0x340] sm:$0xff]
    %v483 = vld [vmem:[#allocation7 + $0x348] sm:$0xff]
    %v484 = vld [vmem:[#allocation7 + $0x350] sm:$0xff]
    %v485 = vld [vmem:[#allocation7 + $0x358] sm:$0xff]
    %v486 = vld [vmem:[#allocation7 + $0x360] sm:$0xff]
    %v487 = vld [vmem:[#allocation7 + $0x368] sm:$0xff]
    %v488 = vld [vmem:[#allocation7 + $0x370] sm:$0xff]
    %v489 = vld [vmem:[#allocation7 + $0x378] sm:$0xff]
    %v490 = vld [vmem:[#allocation7 + $0x380] sm:$0xff]
    %v491 = vld [vmem:[#allocation7 + $0x388] sm:$0xff]
    %v492 = vld [vmem:[#allocation7 + $0x390] sm:$0xff]
    %v493 = vld [vmem:[#allocation7 + $0x398] sm:$0xff]
    %v494 = vld [vmem:[#allocation7 + $0x3a0] sm:$0xff]
    %v495 = vld [vmem:[#allocation7 + $0x3a8] sm:$0xff]
    %v496 = vld [vmem:[#allocation7 + $0x3b0] sm:$0xff]
    %v497 = vld [vmem:[#allocation7 + $0x3b8] sm:$0xff]
    %v498 = vld [vmem:[#allocation7 + $0x3c0] sm:$0xff]
    %v499 = vld [vmem:[#allocation7 + $0x3c8] sm:$0xff]
    %v500 = vld [vmem:[#allocation7 + $0x3d0] sm:$0xff]
    %v501 = vld [vmem:[#allocation7 + $0x3d8] sm:$0xff]
    %v502 = vld [vmem:[#allocation7 + $0x3e0] sm:$0xff]
    %v503 = vld [vmem:[#allocation7 + $0x3e8] sm:$0xff]
    %v504 = vld [vmem:[#allocation7 + $0x3f0] sm:$0xff]
    %v505 = vld [vmem:[#allocation7 + $0x3f8] sm:$0xff]
    %v506 = vld [vmem:[#allocation7 + $0x400] sm:$0xff]
    %v507 = vld [vmem:[#allocation7 + $0x408] sm:$0xff]
    %v508 = vld [vmem:[#allocation7 + $0x410] sm:$0xff]
    %v509 = vld [vmem:[#allocation7 + $0x418] sm:$0xff]
    %v510 = vld [vmem:[#allocation7 + $0x420] sm:$0xff]
    %v511 = vld [vmem:[#allocation7 + $0x428] sm:$0xff]
    %v512 = vld [vmem:[#allocation7 + $0x430] sm:$0xff]
    %v513 = vld [vmem:[#allocation7 + $0x438] sm:$0xff]
    %v514 = vld [vmem:[#allocation7 + $0x440] sm:$0xff]
    %v515 = vld [vmem:[#allocation7 + $0x448] sm:$0xff]
    %v516 = vld [vmem:[#allocation7 + $0x450] sm:$0xff]
    %v517 = vld [vmem:[#allocation7 + $0x458] sm:$0xff]
    %v518 = vld [vmem:[#allocation7 + $0x460] sm:$0xff]
    %v519 = vld [vmem:[#allocation7 + $0x468] sm:$0xff]
    %v520 = vld [vmem:[#allocation7 + $0x470] sm:$0xff]
    %v521 = vld [vmem:[#allocation7 + $0x478] sm:$0xff]
    %v522 = vld [vmem:[#allocation7 + $0x480] sm:$0xff]
    %v523 = vld [vmem:[#allocation7 + $0x488] sm:$0xff]
    %v524 = vld [vmem:[#allocation7 + $0x490] sm:$0xff]
    %v525 = vld [vmem:[#allocation7 + $0x498] sm:$0xff]
    %v526 = vld [vmem:[#allocation7 + $0x4a0] sm:$0xff]
    %v527 = vld [vmem:[#allocation7 + $0x4a8] sm:$0xff]
    %v528 = vld [vmem:[#allocation7 + $0x4b0] sm:$0xff]
    %v529 = vld [vmem:[#allocation7 + $0x4b8] sm:$0xff]
    %v530 = vld [vmem:[#allocation7 + $0x4c0] sm:$0xff]
    %v531 = vld [vmem:[#allocation7 + $0x4c8] sm:$0xff]
    %v532 = vld [vmem:[#allocation7 + $0x4d0] sm:$0xff]
    %v533 = vld [vmem:[#allocation7 + $0x4d8] sm:$0xff]
    %v534 = vld [vmem:[#allocation7 + $0x4e0] sm:$0xff]
    %v535 = vld [vmem:[#allocation7 + $0x4e8] sm:$0xff]
    %v536 = vld [vmem:[#allocation7 + $0x4f0] sm:$0xff]
    %v537 = vld [vmem:[#allocation7 + $0x4f8] sm:$0xff]
    %v538 = vld [vmem:[#allocation7 + $0x500] sm:$0xff]
    %v539 = vld [vmem:[#allocation7 + $0x508] sm:$0xff]
    %v540 = vld [vmem:[#allocation7 + $0x510] sm:$0xff]
    %v541 = vld [vmem:[#allocation7 + $0x518] sm:$0xff]
    %v542 = vld [vmem:[#allocation7 + $0x520] sm:$0xff]
    %v543 = vld [vmem:[#allocation7 + $0x528] sm:$0xff]
    %v544 = vld [vmem:[#allocation7 + $0x530] sm:$0xff]
    %v545 = vld [vmem:[#allocation7 + $0x538] sm:$0xff]
    %v546 = vld [vmem:[#allocation7 + $0x540] sm:$0xff]
    %v547 = vld [vmem:[#allocation7 + $0x548] sm:$0xff]
    %v548 = vld [vmem:[#allocation7 + $0x550] sm:$0xff]
    %v549 = vld [vmem:[#allocation7 + $0x558] sm:$0xff]
    %v550 = vld [vmem:[#allocation7 + $0x560] sm:$0xff]
    %v551 = vld [vmem:[#allocation7 + $0x568] sm:$0xff]
    %v552 = vld [vmem:[#allocation7 + $0x570] sm:$0xff]
    %v553 = vld [vmem:[#allocation7 + $0x578] sm:$0xff]
    %v554 = vld [vmem:[#allocation7 + $0x580] sm:$0xff]
    %v555 = vld [vmem:[#allocation7 + $0x588] sm:$0xff]
    %v556 = vld [vmem:[#allocation7 + $0x590] sm:$0xff]
    %v557 = vld [vmem:[#allocation7 + $0x598] sm:$0xff]
    %v558 = vld [vmem:[#allocation7 + $0x5a0] sm:$0xff]
    %v559 = vld [vmem:[#allocation7 + $0x5a8] sm:$0xff]
    %v560 = vld [vmem:[#allocation7 + $0x5b0] sm:$0xff]
    %v561 = vld [vmem:[#allocation7 + $0x5b8] sm:$0xff]
    %v562 = vld [vmem:[#allocation7 + $0x5c0] sm:$0xff]
    %v563 = vld [vmem:[#allocation7 + $0x5c8] sm:$0xff]
    %v564 = vld [vmem:[#allocation7 + $0x5d0] sm:$0xff]
    %v565 = vld [vmem:[#allocation7 + $0x5d8] sm:$0xff]
    %v566 = vld [vmem:[#allocation7 + $0x5e0] sm:$0xff]
    %v567 = vld [vmem:[#allocation7 + $0x5e8] sm:$0xff]
    %v568 = vld [vmem:[#allocation7 + $0x5f0] sm:$0xff]
    %v569 = vld [vmem:[#allocation7 + $0x5f8] sm:$0xff]
    %v570 = vld [vmem:[#allocation7 + $0x600] sm:$0xff]
    %v571 = vld [vmem:[#allocation7 + $0x608] sm:$0xff]
    %v572 = vld [vmem:[#allocation7 + $0x610] sm:$0xff]
    %v573 = vld [vmem:[#allocation7 + $0x618] sm:$0xff]
    %v574 = vld [vmem:[#allocation7 + $0x620] sm:$0xff]
    %v575 = vld [vmem:[#allocation7 + $0x628] sm:$0xff]
    %v576 = vld [vmem:[#allocation7 + $0x630] sm:$0xff]
    %v577 = vld [vmem:[#allocation7 + $0x638] sm:$0xff]
    %v578 = vld [vmem:[#allocation7 + $0x640] sm:$0xff]
    %v579 = vld [vmem:[#allocation7 + $0x648] sm:$0xff]
    %v580 = vld [vmem:[#allocation7 + $0x650] sm:$0xff]
    %v581 = vld [vmem:[#allocation7 + $0x658] sm:$0xff]
    %v582 = vld [vmem:[#allocation7 + $0x660] sm:$0xff]
    %v583 = vld [vmem:[#allocation7 + $0x668] sm:$0xff]
    %v584 = vld [vmem:[#allocation7 + $0x670] sm:$0xff]
    %v585 = vld [vmem:[#allocation7 + $0x678] sm:$0xff]
    %v586 = vld [vmem:[#allocation7 + $0x680] sm:$0xff]
    %v587 = vld [vmem:[#allocation7 + $0x688] sm:$0xff]
    %v588 = vld [vmem:[#allocation7 + $0x690] sm:$0xff]
    %v589 = vld [vmem:[#allocation7 + $0x698] sm:$0xff]
    %v590 = vld [vmem:[#allocation7 + $0x6a0] sm:$0xff]
    %v591 = vld [vmem:[#allocation7 + $0x6a8] sm:$0xff]
    %v592 = vld [vmem:[#allocation7 + $0x6b0] sm:$0xff]
    %v593 = vld [vmem:[#allocation7 + $0x6b8] sm:$0xff]
    %v594 = vld [vmem:[#allocation7 + $0x6c0] sm:$0xff]
    %v595 = vld [vmem:[#allocation7 + $0x6c8] sm:$0xff]
    %v596 = vld [vmem:[#allocation7 + $0x6d0] sm:$0xff]
    %v597 = vld [vmem:[#allocation7 + $0x6d8] sm:$0xff]
    %v598 = vld [vmem:[#allocation7 + $0x6e0] sm:$0xff]
    %v599 = vld [vmem:[#allocation7 + $0x6e8] sm:$0xff]
    %v600 = vld [vmem:[#allocation7 + $0x6f0] sm:$0xff]
    %v601 = vld [vmem:[#allocation7 + $0x6f8] sm:$0xff]
    %v602 = vld [vmem:[#allocation7 + $0x700] sm:$0xff]
    %v603 = vld [vmem:[#allocation7 + $0x708] sm:$0xff]
    %v604 = vld [vmem:[#allocation7 + $0x710] sm:$0xff]
    %v605 = vld [vmem:[#allocation7 + $0x718] sm:$0xff]
    %v606 = vld [vmem:[#allocation7 + $0x720] sm:$0xff]
    %v607 = vld [vmem:[#allocation7 + $0x728] sm:$0xff]
    %v608 = vld [vmem:[#allocation7 + $0x730] sm:$0xff]
    %v609 = vld [vmem:[#allocation7 + $0x738] sm:$0xff]
    %v610 = vld [vmem:[#allocation7 + $0x740] sm:$0xff]
    %v611 = vld [vmem:[#allocation7 + $0x748] sm:$0xff]
    %v612 = vld [vmem:[#allocation7 + $0x750] sm:$0xff]
    %v613 = vld [vmem:[#allocation7 + $0x758] sm:$0xff]
    %v614 = vld [vmem:[#allocation7 + $0x760] sm:$0xff]
    %v615 = vld [vmem:[#allocation7 + $0x768] sm:$0xff]
    %v616 = vld [vmem:[#allocation7 + $0x770] sm:$0xff]
    %v617 = vld [vmem:[#allocation7 + $0x778] sm:$0xff]
    %v618 = vld [vmem:[#allocation7 + $0x780] sm:$0xff]
    %v619 = vld [vmem:[#allocation7 + $0x788] sm:$0xff]
    %v620 = vld [vmem:[#allocation7 + $0x790] sm:$0xff]
    %v621 = vld [vmem:[#allocation7 + $0x798] sm:$0xff]
    %v622 = vld [vmem:[#allocation7 + $0x7a0] sm:$0xff]
    %v623 = vld [vmem:[#allocation7 + $0x7a8] sm:$0xff]
    %v624 = vld [vmem:[#allocation7 + $0x7b0] sm:$0xff]
    %v625 = vld [vmem:[#allocation7 + $0x7b8] sm:$0xff]
    %v626 = vld [vmem:[#allocation7 + $0x7c0] sm:$0xff]
    %v627 = vld [vmem:[#allocation7 + $0x7c8] sm:$0xff]
    %v628 = vld [vmem:[#allocation7 + $0x7d0] sm:$0xff]
    %v629 = vld [vmem:[#allocation7 + $0x7d8] sm:$0xff]
    %v630 = vld [vmem:[#allocation7 + $0x7e0] sm:$0xff]
    %v631 = vld [vmem:[#allocation7 + $0x7e8] sm:$0xff]
    %v632 = vld [vmem:[#allocation7 + $0x7f0] sm:$0xff]
    %v633 = vld [vmem:[#allocation7 + $0x7f8] sm:$0xff]
    %v634 = vld [vmem:[%s4] sm:$0xf]
    %v636 = vlaneseq
    %v637 = vshrl.u32 %v636, 7
    %v638 = vsub.s32 0, %v637
    %v639 = vrot.slane %v634, %v638
    %v640 = vlaneseq
    %v641 = vshrl.u32 %v640, 7
    %v642 = vsub.s32 1, %v641
    %v643 = vrot.slane %v634, %v642
    %v644 = vlaneseq
    %v645 = vshrl.u32 %v644, 7
    %v646 = vsub.s32 2, %v645
    %v647 = vrot.slane %v634, %v646
    %v648 = vlaneseq
    %v649 = vshrl.u32 %v648, 7
    %v650 = vsub.s32 3, %v649
    %v651 = vrot.slane %v634, %v650
    %656 = vmatprep.subr.mxu0 %v379
    %657 = vmatpush1.msra.mxu0 %v378
    %658 = vmatprep.subr.mxu0 %v383
    %659 = vmatpush1.msra.mxu0 %v382
    %660 = vmatprep.subr.mxu0 %v387
    %661 = vmatpush1.msra.mxu0 %v386
    %662 = vmatprep.subr.mxu0 %v391
    %663 = vmatpush1.msra.mxu0 %v390
    %664 = vmatprep.subr.mxu0 %v395
    %665 = vmatpush1.msra.mxu0 %v394
    %666 = vmatprep.subr.mxu0 %v399
    %667 = vmatpush1.msra.mxu0 %v398
    %668 = vmatprep.subr.mxu0 %v403
    %669 = vmatpush1.msra.mxu0 %v402
    %670 = vmatprep.subr.mxu0 %v407
    %671 = vmatpush1.msra.mxu0 %v406
    %672 = vmatprep.subr.mxu0 %v411
    %673 = vmatpush1.msra.mxu0 %v410
    %674 = vmatprep.subr.mxu0 %v415
    %675 = vmatpush1.msra.mxu0 %v414
    %676 = vmatprep.subr.mxu0 %v419
    %677 = vmatpush1.msra.mxu0 %v418
    %678 = vmatprep.subr.mxu0 %v423
    %679 = vmatpush1.msra.mxu0 %v422
    %680 = vmatprep.subr.mxu0 %v427
    %681 = vmatpush1.msra.mxu0 %v426
    %682 = vmatprep.subr.mxu0 %v431
    %683 = vmatpush1.msra.mxu0 %v430
    %684 = vmatprep.subr.mxu0 %v435
    %685 = vmatpush1.msra.mxu0 %v434
    %686 = vmatprep.subr.mxu0 %v439
    %687 = vmatpush1.msra.mxu0 %v438
    %688 = vmatprep.subr.mxu0 %v443
    %689 = vmatpush1.msra.mxu0 %v442
    %690 = vmatprep.subr.mxu0 %v447
    %691 = vmatpush1.msra.mxu0 %v446
    %692 = vmatprep.subr.mxu0 %v451
    %693 = vmatpush1.msra.mxu0 %v450
    %694 = vmatprep.subr.mxu0 %v455
    %695 = vmatpush1.msra.mxu0 %v454
    %696 = vmatprep.subr.mxu0 %v459
    %697 = vmatpush1.msra.mxu0 %v458
    %698 = vmatprep.subr.mxu0 %v463
    %699 = vmatpush1.msra.mxu0 %v462
    %700 = vmatprep.subr.mxu0 %v467
    %701 = vmatpush1.msra.mxu0 %v466
    %702 = vmatprep.subr.mxu0 %v471
    %703 = vmatpush1.msra.mxu0 %v470
    %704 = vmatprep.subr.mxu0 %v475
    %705 = vmatpush1.msra.mxu0 %v474
    %706 = vmatprep.subr.mxu0 %v479
    %707 = vmatpush1.msra.mxu0 %v478
    %708 = vmatprep.subr.mxu0 %v483
    %709 = vmatpush1.msra.mxu0 %v482
    %710 = vmatprep.subr.mxu0 %v487
    %711 = vmatpush1.msra.mxu0 %v486
    %712 = vmatprep.subr.mxu0 %v491
    %713 = vmatpush1.msra.mxu0 %v490
    %714 = vmatprep.subr.mxu0 %v495
    %715 = vmatpush1.msra.mxu0 %v494
    %716 = vmatprep.subr.mxu0 %v499
    %717 = vmatpush1.msra.mxu0 %v498
    %718 = vmatprep.subr.mxu0 %v503
    %719 = vmatpush1.msra.mxu0 %v502
    %720 = vmatprep.mubr.f32.mxu0 %v375
    %721 = vmatmul.mubr.f32.gmra.mrb[0].mxu0 %v374
    %v722 = vpop.f32.mrb[0].mxu0
    %v723 = vadd.f32 %v639, %v722
    %v724 = vpop.f32.mrb[0].mxu0
    %v725 = vadd.f32 %v643, %v724
    %726 = vdwg.mxu0
    %727 = vmatprep.subr.mxu0 %v507
    %728 = vmatpush1.msra.mxu0 %v506
    %729 = vmatprep.subr.mxu0 %v511
    %730 = vmatpush1.msra.mxu0 %v510
    %731 = vmatprep.subr.mxu0 %v515
    %732 = vmatpush1.msra.mxu0 %v514
    %733 = vmatprep.subr.mxu0 %v519
    %734 = vmatpush1.msra.mxu0 %v518
    %735 = vmatprep.subr.mxu0 %v523
    %736 = vmatpush1.msra.mxu0 %v522
    %737 = vmatprep.subr.mxu0 %v527
    %738 = vmatpush1.msra.mxu0 %v526
    %739 = vmatprep.subr.mxu0 %v531
    %740 = vmatpush1.msra.mxu0 %v530
    %741 = vmatprep.subr.mxu0 %v535
    %742 = vmatpush1.msra.mxu0 %v534
    %743 = vmatprep.subr.mxu0 %v539
    %744 = vmatpush1.msra.mxu0 %v538
    %745 = vmatprep.subr.mxu0 %v543
    %746 = vmatpush1.msra.mxu0 %v542
    %747 = vmatprep.subr.mxu0 %v547
    %748 = vmatpush1.msra.mxu0 %v546
    %749 = vmatprep.subr.mxu0 %v551
    %750 = vmatpush1.msra.mxu0 %v550
    %751 = vmatprep.subr.mxu0 %v555
    %752 = vmatpush1.msra.mxu0 %v554
    %753 = vmatprep.subr.mxu0 %v559
    %754 = vmatpush1.msra.mxu0 %v558
    %755 = vmatprep.subr.mxu0 %v563
    %756 = vmatpush1.msra.mxu0 %v562
    %757 = vmatprep.subr.mxu0 %v567
    %758 = vmatpush1.msra.mxu0 %v566
    %759 = vmatprep.subr.mxu0 %v571
    %760 = vmatpush1.msra.mxu0 %v570
    %761 = vmatprep.subr.mxu0 %v575
    %762 = vmatpush1.msra.mxu0 %v574
    %763 = vmatprep.subr.mxu0 %v579
    %764 = vmatpush1.msra.mxu0 %v578
    %765 = vmatprep.subr.mxu0 %v583
    %766 = vmatpush1.msra.mxu0 %v582
    %767 = vmatprep.subr.mxu0 %v587
    %768 = vmatpush1.msra.mxu0 %v586
    %769 = vmatprep.subr.mxu0 %v591
    %770 = vmatpush1.msra.mxu0 %v590
    %771 = vmatprep.subr.mxu0 %v595
    %772 = vmatpush1.msra.mxu0 %v594
    %773 = vmatprep.subr.mxu0 %v599
    %774 = vmatpush1.msra.mxu0 %v598
    %775 = vmatprep.subr.mxu0 %v603
    %776 = vmatpush1.msra.mxu0 %v602
    %777 = vmatprep.subr.mxu0 %v607
    %778 = vmatpush1.msra.mxu0 %v606
    %779 = vmatprep.subr.mxu0 %v611
    %780 = vmatpush1.msra.mxu0 %v610
    %781 = vmatprep.subr.mxu0 %v615
    %782 = vmatpush1.msra.mxu0 %v614
    %783 = vmatprep.subr.mxu0 %v619
    %784 = vmatpush1.msra.mxu0 %v618
    %785 = vmatprep.subr.mxu0 %v623
    %786 = vmatpush1.msra.mxu0 %v622
    %787 = vmatprep.subr.mxu0 %v627
    %788 = vmatpush1.msra.mxu0 %v626
    %789 = vmatprep.subr.mxu0 %v631
    %790 = vmatpush1.msra.mxu0 %v630
    %791 = vmatprep.mubr.f32.mxu0 %v377
    %792 = vmatmul.mubr.f32.gmra.mrb[0].mxu0 %v376
    %v793 = vpop.f32.mrb[0].mxu0
    %v794 = vadd.f32 %v723, %v793
    %v795 = vpop.f32.mrb[0].mxu0
    %v796 = vadd.f32 %v725, %v795
    %797 = vdwg.mxu0
    %798 = vmatprep.subr.mxu0 %v381
    %799 = vmatpush1.msra.mxu0 %v380
    %800 = vmatprep.subr.mxu0 %v385
    %801 = vmatpush1.msra.mxu0 %v384
    %802 = vmatprep.subr.mxu0 %v389
    %803 = vmatpush1.msra.mxu0 %v388
    %804 = vmatprep.subr.mxu0 %v393
    %805 = vmatpush1.msra.mxu0 %v392
    %806 = vmatprep.subr.mxu0 %v397
    %807 = vmatpush1.msra.mxu0 %v396
    %808 = vmatprep.subr.mxu0 %v401
    %809 = vmatpush1.msra.mxu0 %v400
    %810 = vmatprep.subr.mxu0 %v405
    %811 = vmatpush1.msra.mxu0 %v404
    %812 = vmatprep.subr.mxu0 %v409
    %813 = vmatpush1.msra.mxu0 %v408
    %814 = vmatprep.subr.mxu0 %v413
    %815 = vmatpush1.msra.mxu0 %v412
    %816 = vmatprep.subr.mxu0 %v417
    %817 = vmatpush1.msra.mxu0 %v416
    %818 = vmatprep.subr.mxu0 %v421
    %819 = vmatpush1.msra.mxu0 %v420
    %820 = vmatprep.subr.mxu0 %v425
    %821 = vmatpush1.msra.mxu0 %v424
    %822 = vmatprep.subr.mxu0 %v429
    %823 = vmatpush1.msra.mxu0 %v428
    %824 = vmatprep.subr.mxu0 %v433
    %825 = vmatpush1.msra.mxu0 %v432
    %826 = vmatprep.subr.mxu0 %v437
    %827 = vmatpush1.msra.mxu0 %v436
    %828 = vmatprep.subr.mxu0 %v441
    %829 = vmatpush1.msra.mxu0 %v440
    %830 = vmatprep.subr.mxu0 %v445
    %831 = vmatpush1.msra.mxu0 %v444
    %832 = vmatprep.subr.mxu0 %v449
    %833 = vmatpush1.msra.mxu0 %v448
    %834 = vmatprep.subr.mxu0 %v453
    %835 = vmatpush1.msra.mxu0 %v452
    %836 = vmatprep.subr.mxu0 %v457
    %837 = vmatpush1.msra.mxu0 %v456
    %838 = vmatprep.subr.mxu0 %v461
    %839 = vmatpush1.msra.mxu0 %v460
    %840 = vmatprep.subr.mxu0 %v465
    %841 = vmatpush1.msra.mxu0 %v464
    %842 = vmatprep.subr.mxu0 %v469
    %843 = vmatpush1.msra.mxu0 %v468
    %844 = vmatprep.subr.mxu0 %v473
    %845 = vmatpush1.msra.mxu0 %v472
    %846 = vmatprep.subr.mxu0 %v477
    %847 = vmatpush1.msra.mxu0 %v476
    %848 = vmatprep.subr.mxu0 %v481
    %849 = vmatpush1.msra.mxu0 %v480
    %850 = vmatprep.subr.mxu0 %v485
    %851 = vmatpush1.msra.mxu0 %v484
    %852 = vmatprep.subr.mxu0 %v489
    %853 = vmatpush1.msra.mxu0 %v488
    %854 = vmatprep.subr.mxu0 %v493
    %855 = vmatpush1.msra.mxu0 %v492
    %856 = vmatprep.subr.mxu0 %v497
    %857 = vmatpush1.msra.mxu0 %v496
    %858 = vmatprep.subr.mxu0 %v501
    %859 = vmatpush1.msra.mxu0 %v500
    %860 = vmatprep.subr.mxu0 %v505
    %861 = vmatpush1.msra.mxu0 %v504
    %862 = vmatprep.mubr.f32.mxu0 %v375
    %863 = vmatmul.mubr.f32.gmra.mrb[0].mxu0 %v374
    %v864 = vpop.f32.mrb[0].mxu0
    %v865 = vadd.f32 %v647, %v864
    %v866 = vpop.f32.mrb[0].mxu0
    %v867 = vadd.f32 %v651, %v866
    %868 = vdwg.mxu0
    %869 = vmatprep.subr.mxu0 %v509
    %870 = vmatpush1.msra.mxu0 %v508
    %871 = vmatprep.subr.mxu0 %v513
    %872 = vmatpush1.msra.mxu0 %v512
    %873 = vmatprep.subr.mxu0 %v517
    %874 = vmatpush1.msra.mxu0 %v516
    %875 = vmatprep.subr.mxu0 %v521
    %876 = vmatpush1.msra.mxu0 %v520
    %877 = vmatprep.subr.mxu0 %v525
    %878 = vmatpush1.msra.mxu0 %v524
    %879 = vmatprep.subr.mxu0 %v529
    %880 = vmatpush1.msra.mxu0 %v528
    %881 = vmatprep.subr.mxu0 %v533
    %882 = vmatpush1.msra.mxu0 %v532
    %883 = vmatprep.subr.mxu0 %v537
    %884 = vmatpush1.msra.mxu0 %v536
    %885 = vmatprep.subr.mxu0 %v541
    %886 = vmatpush1.msra.mxu0 %v540
    %887 = vmatprep.subr.mxu0 %v545
    %888 = vmatpush1.msra.mxu0 %v544
    %889 = vmatprep.subr.mxu0 %v549
    %890 = vmatpush1.msra.mxu0 %v548
    %891 = vmatprep.subr.mxu0 %v553
    %892 = vmatpush1.msra.mxu0 %v552
    %893 = vmatprep.subr.mxu0 %v557
    %894 = vmatpush1.msra.mxu0 %v556
    %895 = vmatprep.subr.mxu0 %v561
    %896 = vmatpush1.msra.mxu0 %v560
    %897 = vmatprep.subr.mxu0 %v565
    %898 = vmatpush1.msra.mxu0 %v564
    %899 = vmatprep.subr.mxu0 %v569
    %900 = vmatpush1.msra.mxu0 %v568
    %901 = vmatprep.subr.mxu0 %v573
    %902 = vmatpush1.msra.mxu0 %v572
    %903 = vmatprep.subr.mxu0 %v577
    %904 = vmatpush1.msra.mxu0 %v576
    %905 = vmatprep.subr.mxu0 %v581
    %906 = vmatpush1.msra.mxu0 %v580
    %907 = vmatprep.subr.mxu0 %v585
    %908 = vmatpush1.msra.mxu0 %v584
    %909 = vmatprep.subr.mxu0 %v589
    %910 = vmatpush1.msra.mxu0 %v588
    %911 = vmatprep.subr.mxu0 %v593
    %912 = vmatpush1.msra.mxu0 %v592
    %913 = vmatprep.subr.mxu0 %v597
    %914 = vmatpush1.msra.mxu0 %v596
    %915 = vmatprep.subr.mxu0 %v601
    %916 = vmatpush1.msra.mxu0 %v600
    %917 = vmatprep.subr.mxu0 %v605
    %918 = vmatpush1.msra.mxu0 %v604
    %919 = vmatprep.subr.mxu0 %v609
    %920 = vmatpush1.msra.mxu0 %v608
    %921 = vmatprep.subr.mxu0 %v613
    %922 = vmatpush1.msra.mxu0 %v612
    %923 = vmatprep.subr.mxu0 %v617
    %924 = vmatpush1.msra.mxu0 %v616
    %925 = vmatprep.subr.mxu0 %v621
    %926 = vmatpush1.msra.mxu0 %v620
    %927 = vmatprep.subr.mxu0 %v625
    %928 = vmatpush1.msra.mxu0 %v624
    %929 = vmatprep.subr.mxu0 %v629
    %930 = vmatpush1.msra.mxu0 %v628
    %931 = vmatprep.subr.mxu0 %v633
    %932 = vmatpush1.msra.mxu0 %v632
    %933 = vmatprep.mubr.f32.mxu0 %v377
    %934 = vmatmul.mubr.f32.gmra.mrb[0].mxu0 %v376
    %v935 = vpop.f32.mrb[0].mxu0
    %v936 = vadd.f32 %v865, %v935
    %v937 = vpop.f32.mrb[0].mxu0
    %v938 = vadd.f32 %v867, %v937
    %939 = vdwg.mxu0
    %v940 = vmax.f32 %v794, 0.0
    %v941 = vmax.f32 %v796, 0.0
    %v942 = vmax.f32 %v936, 0.0
    %v943 = vmax.f32 %v938, 0.0
    %v944 = vld [vmem:[#allocation8] sm:$0xff]
    %v945 = vld [vmem:[#allocation8 + $0x8] sm:$0xff]
    %v946 = vld [vmem:[#allocation8 + $0x10] sm:$0xff]
    %v947 = vld [vmem:[#allocation8 + $0x18] sm:$0xff]
    %v948 = vld [vmem:[#allocation8 + $0x20] sm:$0xff]
    %v949 = vld [vmem:[#allocation8 + $0x28] sm:$0xff]
    %v950 = vld [vmem:[#allocation8 + $0x30] sm:$0xff]
    %v951 = vld [vmem:[#allocation8 + $0x38] sm:$0xff]
    %v952 = vld [vmem:[#allocation8 + $0x40] sm:$0xff]
    %v953 = vld [vmem:[#allocation8 + $0x48] sm:$0xff]
    %v954 = vld [vmem:[#allocation8 + $0x50] sm:$0xff]
    %v955 = vld [vmem:[#allocation8 + $0x58] sm:$0xff]
    %v956 = vld [vmem:[#allocation8 + $0x60] sm:$0xff]
    %v957 = vld [vmem:[#allocation8 + $0x68] sm:$0xff]
    %v958 = vld [vmem:[#allocation8 + $0x70] sm:$0xff]
    %v959 = vld [vmem:[#allocation8 + $0x78] sm:$0xff]
    %v960 = vld [vmem:[#allocation8 + $0x80] sm:$0xff]
    %v961 = vld [vmem:[#allocation8 + $0x88] sm:$0xff]
    %v962 = vld [vmem:[#allocation8 + $0x90] sm:$0xff]
    %v963 = vld [vmem:[#allocation8 + $0x98] sm:$0xff]
    %v964 = vld [vmem:[#allocation8 + $0xa0] sm:$0xff]
    %v965 = vld [vmem:[#allocation8 + $0xa8] sm:$0xff]
    %v966 = vld [vmem:[#allocation8 + $0xb0] sm:$0xff]
    %v967 = vld [vmem:[#allocation8 + $0xb8] sm:$0xff]
    %v968 = vld [vmem:[#allocation8 + $0xc0] sm:$0xff]
    %v969 = vld [vmem:[#allocation8 + $0xc8] sm:$0xff]
    %v970 = vld [vmem:[#allocation8 + $0xd0] sm:$0xff]
    %v971 = vld [vmem:[#allocation8 + $0xd8] sm:$0xff]
    %v972 = vld [vmem:[#allocation8 + $0xe0] sm:$0xff]
    %v973 = vld [vmem:[#allocation8 + $0xe8] sm:$0xff]
    %v974 = vld [vmem:[#allocation8 + $0xf0] sm:$0xff]
    %v975 = vld [vmem:[#allocation8 + $0xf8] sm:$0xff]
    %v976 = vld [vmem:[#allocation8 + $0x100] sm:$0xff]
    %v977 = vld [vmem:[#allocation8 + $0x108] sm:$0xff]
    %v978 = vld [vmem:[#allocation8 + $0x110] sm:$0xff]
    %v979 = vld [vmem:[#allocation8 + $0x118] sm:$0xff]
    %v980 = vld [vmem:[#allocation8 + $0x120] sm:$0xff]
    %v981 = vld [vmem:[#allocation8 + $0x128] sm:$0xff]
    %v982 = vld [vmem:[#allocation8 + $0x130] sm:$0xff]
    %v983 = vld [vmem:[#allocation8 + $0x138] sm:$0xff]
    %v984 = vld [vmem:[#allocation8 + $0x140] sm:$0xff]
    %v985 = vld [vmem:[#allocation8 + $0x148] sm:$0xff]
    %v986 = vld [vmem:[#allocation8 + $0x150] sm:$0xff]
    %v987 = vld [vmem:[#allocation8 + $0x158] sm:$0xff]
    %v988 = vld [vmem:[#allocation8 + $0x160] sm:$0xff]
    %v989 = vld [vmem:[#allocation8 + $0x168] sm:$0xff]
    %v990 = vld [vmem:[#allocation8 + $0x170] sm:$0xff]
    %v991 = vld [vmem:[#allocation8 + $0x178] sm:$0xff]
    %v992 = vld [vmem:[#allocation8 + $0x180] sm:$0xff]
    %v993 = vld [vmem:[#allocation8 + $0x188] sm:$0xff]
    %v994 = vld [vmem:[#allocation8 + $0x190] sm:$0xff]
    %v995 = vld [vmem:[#allocation8 + $0x198] sm:$0xff]
    %v996 = vld [vmem:[#allocation8 + $0x1a0] sm:$0xff]
    %v997 = vld [vmem:[#allocation8 + $0x1a8] sm:$0xff]
    %v998 = vld [vmem:[#allocation8 + $0x1b0] sm:$0xff]
    %v999 = vld [vmem:[#allocation8 + $0x1b8] sm:$0xff]
    %v1000 = vld [vmem:[#allocation8 + $0x1c0] sm:$0xff]
    %v1001 = vld [vmem:[#allocation8 + $0x1c8] sm:$0xff]
    %v1002 = vld [vmem:[#allocation8 + $0x1d0] sm:$0xff]
    %v1003 = vld [vmem:[#allocation8 + $0x1d8] sm:$0xff]
    %v1004 = vld [vmem:[#allocation8 + $0x1e0] sm:$0xff]
    %v1005 = vld [vmem:[#allocation8 + $0x1e8] sm:$0xff]
    %v1006 = vld [vmem:[#allocation8 + $0x1f0] sm:$0xff]
    %v1007 = vld [vmem:[#allocation8 + $0x1f8] sm:$0xff]
    %v1008 = vld [vmem:[#allocation8 + $0x200] sm:$0xff]
    %v1009 = vld [vmem:[#allocation8 + $0x208] sm:$0xff]
    %v1010 = vld [vmem:[#allocation8 + $0x210] sm:$0xff]
    %v1011 = vld [vmem:[#allocation8 + $0x218] sm:$0xff]
    %v1012 = vld [vmem:[#allocation8 + $0x220] sm:$0xff]
    %v1013 = vld [vmem:[#allocation8 + $0x228] sm:$0xff]
    %v1014 = vld [vmem:[#allocation8 + $0x230] sm:$0xff]
    %v1015 = vld [vmem:[#allocation8 + $0x238] sm:$0xff]
    %v1016 = vld [vmem:[#allocation8 + $0x240] sm:$0xff]
    %v1017 = vld [vmem:[#allocation8 + $0x248] sm:$0xff]
    %v1018 = vld [vmem:[#allocation8 + $0x250] sm:$0xff]
    %v1019 = vld [vmem:[#allocation8 + $0x258] sm:$0xff]
    %v1020 = vld [vmem:[#allocation8 + $0x260] sm:$0xff]
    %v1021 = vld [vmem:[#allocation8 + $0x268] sm:$0xff]
    %v1022 = vld [vmem:[#allocation8 + $0x270] sm:$0xff]
    %v1023 = vld [vmem:[#allocation8 + $0x278] sm:$0xff]
    %v1024 = vld [vmem:[#allocation8 + $0x280] sm:$0xff]
    %v1025 = vld [vmem:[#allocation8 + $0x288] sm:$0xff]
    %v1026 = vld [vmem:[#allocation8 + $0x290] sm:$0xff]
    %v1027 = vld [vmem:[#allocation8 + $0x298] sm:$0xff]
    %v1028 = vld [vmem:[#allocation8 + $0x2a0] sm:$0xff]
    %v1029 = vld [vmem:[#allocation8 + $0x2a8] sm:$0xff]
    %v1030 = vld [vmem:[#allocation8 + $0x2b0] sm:$0xff]
    %v1031 = vld [vmem:[#allocation8 + $0x2b8] sm:$0xff]
    %v1032 = vld [vmem:[#allocation8 + $0x2c0] sm:$0xff]
    %v1033 = vld [vmem:[#allocation8 + $0x2c8] sm:$0xff]
    %v1034 = vld [vmem:[#allocation8 + $0x2d0] sm:$0xff]
    %v1035 = vld [vmem:[#allocation8 + $0x2d8] sm:$0xff]
    %v1036 = vld [vmem:[#allocation8 + $0x2e0] sm:$0xff]
    %v1037 = vld [vmem:[#allocation8 + $0x2e8] sm:$0xff]
    %v1038 = vld [vmem:[#allocation8 + $0x2f0] sm:$0xff]
    %v1039 = vld [vmem:[#allocation8 + $0x2f8] sm:$0xff]
    %v1040 = vld [vmem:[#allocation8 + $0x300] sm:$0xff]
    %v1041 = vld [vmem:[#allocation8 + $0x308] sm:$0xff]
    %v1042 = vld [vmem:[#allocation8 + $0x310] sm:$0xff]
    %v1043 = vld [vmem:[#allocation8 + $0x318] sm:$0xff]
    %v1044 = vld [vmem:[#allocation8 + $0x320] sm:$0xff]
    %v1045 = vld [vmem:[#allocation8 + $0x328] sm:$0xff]
    %v1046 = vld [vmem:[#allocation8 + $0x330] sm:$0xff]
    %v1047 = vld [vmem:[#allocation8 + $0x338] sm:$0xff]
    %v1048 = vld [vmem:[#allocation8 + $0x340] sm:$0xff]
    %v1049 = vld [vmem:[#allocation8 + $0x348] sm:$0xff]
    %v1050 = vld [vmem:[#allocation8 + $0x350] sm:$0xff]
    %v1051 = vld [vmem:[#allocation8 + $0x358] sm:$0xff]
    %v1052 = vld [vmem:[#allocation8 + $0x360] sm:$0xff]
    %v1053 = vld [vmem:[#allocation8 + $0x368] sm:$0xff]
    %v1054 = vld [vmem:[#allocation8 + $0x370] sm:$0xff]
    %v1055 = vld [vmem:[#allocation8 + $0x378] sm:$0xff]
    %v1056 = vld [vmem:[#allocation8 + $0x380] sm:$0xff]
    %v1057 = vld [vmem:[#allocation8 + $0x388] sm:$0xff]
    %v1058 = vld [vmem:[#allocation8 + $0x390] sm:$0xff]
    %v1059 = vld [vmem:[#allocation8 + $0x398] sm:$0xff]
    %v1060 = vld [vmem:[#allocation8 + $0x3a0] sm:$0xff]
    %v1061 = vld [vmem:[#allocation8 + $0x3a8] sm:$0xff]
    %v1062 = vld [vmem:[#allocation8 + $0x3b0] sm:$0xff]
    %v1063 = vld [vmem:[#allocation8 + $0x3b8] sm:$0xff]
    %v1064 = vld [vmem:[#allocation8 + $0x3c0] sm:$0xff]
    %v1065 = vld [vmem:[#allocation8 + $0x3c8] sm:$0xff]
    %v1066 = vld [vmem:[#allocation8 + $0x3d0] sm:$0xff]
    %v1067 = vld [vmem:[#allocation8 + $0x3d8] sm:$0xff]
    %v1068 = vld [vmem:[#allocation8 + $0x3e0] sm:$0xff]
    %v1069 = vld [vmem:[#allocation8 + $0x3e8] sm:$0xff]
    %v1070 = vld [vmem:[#allocation8 + $0x3f0] sm:$0xff]
    %v1071 = vld [vmem:[#allocation8 + $0x3f8] sm:$0xff]
    %v1072 = vld [vmem:[%s6] sm:$0x3]
    %v1074 = vlaneseq
    %v1075 = vshrl.u32 %v1074, 7
    %v1076 = vsub.s32 0, %v1075
    %v1077 = vrot.slane %v1072, %v1076
    %v1078 = vlaneseq
    %v1079 = vshrl.u32 %v1078, 7
    %v1080 = vsub.s32 1, %v1079
    %v1081 = vrot.slane %v1072, %v1080
    %1084 = vmatprep.subr.mxu0 %v945
    %1085 = vmatpush1.msra.mxu0 %v944
    %1086 = vmatprep.subr.mxu0 %v947
    %1087 = vmatpush1.msra.mxu0 %v946
    %1088 = vmatprep.subr.mxu0 %v949
    %1089 = vmatpush1.msra.mxu0 %v948
    %1090 = vmatprep.subr.mxu0 %v951
    %1091 = vmatpush1.msra.mxu0 %v950
    %1092 = vmatprep.subr.mxu0 %v953
    %1093 = vmatpush1.msra.mxu0 %v952
    %1094 = vmatprep.subr.mxu0 %v955
    %1095 = vmatpush1.msra.mxu0 %v954
    %1096 = vmatprep.subr.mxu0 %v957
    %1097 = vmatpush1.msra.mxu0 %v956
    %1098 = vmatprep.subr.mxu0 %v959
    %1099 = vmatpush1.msra.mxu0 %v958
    %1100 = vmatprep.subr.mxu0 %v961
    %1101 = vmatpush1.msra.mxu0 %v960
    %1102 = vmatprep.subr.mxu0 %v963
    %1103 = vmatpush1.msra.mxu0 %v962
    %1104 = vmatprep.subr.mxu0 %v965
    %1105 = vmatpush1.msra.mxu0 %v964
    %1106 = vmatprep.subr.mxu0 %v967
    %1107 = vmatpush1.msra.mxu0 %v966
    %1108 = vmatprep.subr.mxu0 %v969
    %1109 = vmatpush1.msra.mxu0 %v968
    %1110 = vmatprep.subr.mxu0 %v971
    %1111 = vmatpush1.msra.mxu0 %v970
    %1112 = vmatprep.subr.mxu0 %v973
    %1113 = vmatpush1.msra.mxu0 %v972
    %1114 = vmatprep.subr.mxu0 %v975
    %1115 = vmatpush1.msra.mxu0 %v974
    %1116 = vmatprep.subr.mxu0 %v977
    %1117 = vmatpush1.msra.mxu0 %v976
    %1118 = vmatprep.subr.mxu0 %v979
    %1119 = vmatpush1.msra.mxu0 %v978
    %1120 = vmatprep.subr.mxu0 %v981
    %1121 = vmatpush1.msra.mxu0 %v980
    %1122 = vmatprep.subr.mxu0 %v983
    %1123 = vmatpush1.msra.mxu0 %v982
    %1124 = vmatprep.subr.mxu0 %v985
    %1125 = vmatpush1.msra.mxu0 %v984
    %1126 = vmatprep.subr.mxu0 %v987
    %1127 = vmatpush1.msra.mxu0 %v986
    %1128 = vmatprep.subr.mxu0 %v989
    %1129 = vmatpush1.msra.mxu0 %v988
    %1130 = vmatprep.subr.mxu0 %v991
    %1131 = vmatpush1.msra.mxu0 %v990
    %1132 = vmatprep.subr.mxu0 %v993
    %1133 = vmatpush1.msra.mxu0 %v992
    %1134 = vmatprep.subr.mxu0 %v995
    %1135 = vmatpush1.msra.mxu0 %v994
    %1136 = vmatprep.subr.mxu0 %v997
    %1137 = vmatpush1.msra.mxu0 %v996
    %1138 = vmatprep.subr.mxu0 %v999
    %1139 = vmatpush1.msra.mxu0 %v998
    %1140 = vmatprep.subr.mxu0 %v1001
    %1141 = vmatpush1.msra.mxu0 %v1000
    %1142 = vmatprep.subr.mxu0 %v1003
    %1143 = vmatpush1.msra.mxu0 %v1002
    %1144 = vmatprep.subr.mxu0 %v1005
    %1145 = vmatpush1.msra.mxu0 %v1004
    %1146 = vmatprep.subr.mxu0 %v1007
    %1147 = vmatpush1.msra.mxu0 %v1006
    %1148 = vmatprep.mubr.f32.mxu0 %v941
    %1149 = vmatmul.mubr.f32.gmra.mrb[0].mxu0 %v940
    %v1150 = vpop.f32.mrb[0].mxu0
    %v1151 = vadd.f32 %v1077, %v1150
    %v1152 = vpop.f32.mrb[0].mxu0
    %v1153 = vadd.f32 %v1081, %v1152
    %1154 = vdwg.mxu0
    %1155 = vmatprep.subr.mxu0 %v1009
    %1156 = vmatpush1.msra.mxu0 %v1008
    %1157 = vmatprep.subr.mxu0 %v1011
    %1158 = vmatpush1.msra.mxu0 %v1010
    %1159 = vmatprep.subr.mxu0 %v1013
    %1160 = vmatpush1.msra.mxu0 %v1012
    %1161 = vmatprep.subr.mxu0 %v1015
    %1162 = vmatpush1.msra.mxu0 %v1014
    %1163 = vmatprep.subr.mxu0 %v1017
    %1164 = vmatpush1.msra.mxu0 %v1016
    %1165 = vmatprep.subr.mxu0 %v1019
    %1166 = vmatpush1.msra.mxu0 %v1018
    %1167 = vmatprep.subr.mxu0 %v1021
    %1168 = vmatpush1.msra.mxu0 %v1020
    %1169 = vmatprep.subr.mxu0 %v1023
    %1170 = vmatpush1.msra.mxu0 %v1022
    %1171 = vmatprep.subr.mxu0 %v1025
    %1172 = vmatpush1.msra.mxu0 %v1024
    %1173 = vmatprep.subr.mxu0 %v1027
    %1174 = vmatpush1.msra.mxu0 %v1026
    %1175 = vmatprep.subr.mxu0 %v1029
    %1176 = vmatpush1.msra.mxu0 %v1028
    %1177 = vmatprep.subr.mxu0 %v1031
    %1178 = vmatpush1.msra.mxu0 %v1030
    %1179 = vmatprep.subr.mxu0 %v1033
    %1180 = vmatpush1.msra.mxu0 %v1032
    %1181 = vmatprep.subr.mxu0 %v1035
    %1182 = vmatpush1.msra.mxu0 %v1034
    %1183 = vmatprep.subr.mxu0 %v1037
    %1184 = vmatpush1.msra.mxu0 %v1036
    %1185 = vmatprep.subr.mxu0 %v1039
    %1186 = vmatpush1.msra.mxu0 %v1038
    %1187 = vmatprep.subr.mxu0 %v1041
    %1188 = vmatpush1.msra.mxu0 %v1040
    %1189 = vmatprep.subr.mxu0 %v1043
    %1190 = vmatpush1.msra.mxu0 %v1042
    %1191 = vmatprep.subr.mxu0 %v1045
    %1192 = vmatpush1.msra.mxu0 %v1044
    %1193 = vmatprep.subr.mxu0 %v1047
    %1194 = vmatpush1.msra.mxu0 %v1046
    %1195 = vmatprep.subr.mxu0 %v1049
    %1196 = vmatpush1.msra.mxu0 %v1048
    %1197 = vmatprep.subr.mxu0 %v1051
    %1198 = vmatpush1.msra.mxu0 %v1050
    %1199 = vmatprep.subr.mxu0 %v1053
    %1200 = vmatpush1.msra.mxu0 %v1052
    %1201 = vmatprep.subr.mxu0 %v1055
    %1202 = vmatpush1.msra.mxu0 %v1054
    %1203 = vmatprep.subr.mxu0 %v1057
    %1204 = vmatpush1.msra.mxu0 %v1056
    %1205 = vmatprep.subr.mxu0 %v1059
    %1206 = vmatpush1.msra.mxu0 %v1058
    %1207 = vmatprep.subr.mxu0 %v1061
    %1208 = vmatpush1.msra.mxu0 %v1060
    %1209 = vmatprep.subr.mxu0 %v1063
    %1210 = vmatpush1.msra.mxu0 %v1062
    %1211 = vmatprep.subr.mxu0 %v1065
    %1212 = vmatpush1.msra.mxu0 %v1064
    %1213 = vmatprep.subr.mxu0 %v1067
    %1214 = vmatpush1.msra.mxu0 %v1066
    %1215 = vmatprep.subr.mxu0 %v1069
    %1216 = vmatpush1.msra.mxu0 %v1068
    %1217 = vmatprep.subr.mxu0 %v1071
    %1218 = vmatpush1.msra.mxu0 %v1070
    %1219 = vmatprep.mubr.f32.mxu0 %v943
    %1220 = vmatmul.mubr.f32.gmra.mrb[0].mxu0 %v942
    %v1221 = vpop.f32.mrb[0].mxu0
    %v1222 = vadd.f32 %v1151, %v1221
    %v1223 = vpop.f32.mrb[0].mxu0
    %v1224 = vadd.f32 %v1153, %v1223
    %1225 = vdwg.mxu0
    %1226 = vst [vmem:[#allocation10] sm:$0xff] %v1222
    %1227 = vst [vmem:[#allocation10 + $0x8] sm:$0xff] %v1224
    // Predicated region
    $region46: #{tpu_custom_call.1} parent=1 // pred_check
      _
    $region47: #{tpu_custom_call.1} parent=1 // pred_check_branch
      %1229 = sbr.rel (0) target = $region49
    $region48: #{tpu_custom_call.1} parent=1 // pred_region
      %s1231 = ssub.s32 256, 256
      %1232 = vsyncadd [#allocation4], %s1231
      %s1234 = sshll.u32 [#allocation10], 4
      %s1235 = int_to_ptr.vmem [resolvable:$true] %s1234
      %1237 = dma.vmem_to_hbm [thread:$0]  %s1235, 256, %s7, [#allocation4]
    $region49: #{tpu_custom_call.1} parent=1 // pred_fallthru
      _
    // Predicated region
    $region50: #{tpu_custom_call.1} parent=1 // pred_check
      _
    $region51: #{tpu_custom_call.1} parent=1 // pred_check_branch
      %1239 = sbr.rel (0) target = $region53
    $region52: #{tpu_custom_call.1} parent=1 // pred_region
      %1240 = dma.done [#allocation4], 256
    $region53: #{tpu_custom_call.1} parent=1 // pred_fallthru
      _
    %1241 = vsyncpa [#allocation3], 1
    %1242 = vsyncpa [#allocation6], 1
    %1243 = vsyncpa [#allocation9], 1
    %1244 = vsyncpa [#allocation4], 1

</llo_original>
